<compile_context>
chip_gen: v6e
topology: v6e:2x2x1
jax: 0.10.0
libtpu: 0.0.40
codegen_flags: <defaults>
</compile_context>

<pallas_src>
import functools

import jax
import jax.numpy as jnp
from jax.experimental import pallas as pl
from jax.experimental.pallas import tpu as pltpu

LANE = 128
_MiB = 1024 * 1024
_FUSED_VMEM_BUDGET = 28 * _MiB   # conservative: fits v7x's 64 MiB VMEM with headroom


def _round_up(x, m):
    return (x + m - 1) // m * m


def _pad2(a, rows, cols, dtype):
    a = jnp.asarray(a, dtype)
    pr, pc = rows - a.shape[0], cols - a.shape[1]
    if pr or pc:
        a = jnp.pad(a, ((0, pr), (0, pc)))
    return a


# ---------------------------------------------------------------------------
# Fused path: whole (padded) problem is VMEM resident; one pallas_call runs all
# four layer applications and reads the adjacency from HBM exactly once.
# ---------------------------------------------------------------------------
def _gcn_fused_kernel(adj_ref, h0_ref, w_ref, b_ref, o_ref, ha_ref, hb_ref, *, n_layers):
    ha_ref[...] = h0_ref[...]
    bufs = (ha_ref, hb_ref)
    for l in range(n_layers):
        cur = bufs[l % 2]
        # Sum-aggregation over in-neighbors: (N, N) @ (N, F) -> (N, F), f32 accumulation.
        agg = jnp.dot(adj_ref[...], cur[...], preferred_element_type=jnp.float32)
        # Linear: (N, F) @ (F, F) + b, bf16 operands with f32 accumulation.
        y = jnp.dot(agg.astype(jnp.bfloat16), w_ref[l],
                    preferred_element_type=jnp.float32)
        y = y + b_ref[l]
        if l < n_layers - 1:
            bufs[(l + 1) % 2][...] = jnp.maximum(y, 0.0).astype(jnp.bfloat16)
        else:
            o_ref[...] = y.astype(o_ref.dtype)


def _gcn_fused(adj, x, weights, biases):
    n, d_in = x.shape
    d_out = weights[-1].shape[1]
    n_layers = len(weights)
    F = _round_up(max([d_in] + [w.shape[1] for w in weights]), LANE)
    n_pad = _round_up(n, LANE)

    adj_p = _pad2(adj, n_pad, n_pad, jnp.bfloat16)          # edge counts exact in bf16
    h0 = _pad2(x, n_pad, F, jnp.bfloat16)
    w_stack = jnp.stack([_pad2(w, F, F, jnp.bfloat16) for w in weights])
    b_stack = jnp.stack([_pad2(b, 1, F, jnp.float32) for b in biases])

    flops = n_layers * (2 * n_pad * n_pad * F + 2 * n_pad * F * F)
    bytes_accessed = (adj_p.size * 2 + h0.size * 2 + w_stack.size * 2
                      + b_stack.size * 4 + n_pad * F * 4)

    out = pl.pallas_call(
        functools.partial(_gcn_fused_kernel, n_layers=n_layers),
        out_shape=jax.ShapeDtypeStruct((n_pad, F), jnp.float32),
        in_specs=[pl.BlockSpec(memory_space=pltpu.MemorySpace.VMEM)] * 4,
        out_specs=pl.BlockSpec(memory_space=pltpu.MemorySpace.VMEM),
        scratch_shapes=[pltpu.VMEM((n_pad, F), jnp.bfloat16),
                        pltpu.VMEM((n_pad, F), jnp.bfloat16)],
        compiler_params=pltpu.CompilerParams(vmem_limit_bytes=48 * _MiB),
        cost_estimate=pl.CostEstimate(flops=flops, transcendentals=0,
                                      bytes_accessed=bytes_accessed),
    )(adj_p, h0, w_stack, b_stack)
    return out[:n, :d_out]


# ---------------------------------------------------------------------------
# General path: one pallas_call per layer, grid = (dst-node tiles, src-node tiles).
# The adjacency tile and the source-feature tile are pipelined; the aggregation is
# accumulated in an f32 VMEM scratch; on the last K step the linear + bias (+ ReLU)
# is applied and the lane-dense output tile is stored.  Per-step VMEM is O(tile).
# ---------------------------------------------------------------------------
def _gcn_layer_kernel(a_ref, h_ref, w_ref, b_ref, o_ref, acc_ref, *, apply_relu):
    k = pl.program_id(1)

    @pl.when(k == 0)
    def _():
        acc_ref[...] = jnp.zeros_like(acc_ref)

    # Partial sum-aggregation for this (dst-tile, src-tile) block, f32 accumulation.
    acc_ref[...] += jnp.dot(a_ref[...], h_ref[...], preferred_element_type=jnp.float32)

    @pl.when(k == pl.num_programs(1) - 1)
    def _():
        y = jnp.dot(acc_ref[...].astype(w_ref.dtype), w_ref[...],
                    preferred_element_type=jnp.float32) + b_ref[...]
        if apply_relu:
            y = jnp.maximum(y, 0.0)
        o_ref[...] = y.astype(o_ref.dtype)


def _gcn_layer_tiled(adj, h, w, b, *, relu, tile_n, tile_k, out_dtype):
    n_pad = adj.shape[0]
    f_in = h.shape[1]
    f_out = w.shape[1]
    assert n_pad % tile_n == 0 and n_pad % tile_k == 0
    grid = (n_pad // tile_n, n_pad // tile_k)

    out_bytes = jnp.dtype(out_dtype).itemsize
    flops = 2 * n_pad * n_pad * f_in + 2 * n_pad * f_in * f_out
    bytes_accessed = (n_pad * n_pad * 2                     # adjacency streamed once
                      + grid[0] * n_pad * f_in * 2          # H re-streamed per node tile
                      + f_in * f_out * 2 + f_out * 4
                      + n_pad * f_out * out_bytes)

    return pl.pallas_call(
        functools.partial(_gcn_layer_kernel, apply_relu=relu),
        out_shape=jax.ShapeDtypeStruct((n_pad, f_out), out_dtype),
        grid=grid,
        in_specs=[
            pl.BlockSpec((tile_n, tile_k), lambda i, k: (i, k)),   # adjacency tile
            pl.BlockSpec((tile_k, f_in), lambda i, k: (k, 0)),     # source-node features
            pl.BlockSpec((f_in, f_out), lambda i, k: (0, 0)),      # weights (resident)
            pl.BlockSpec((1, f_out), lambda i, k: (0, 0)),         # bias (resident)
        ],
        out_specs=pl.BlockSpec((tile_n, f_out), lambda i, k: (i, 0)),
        scratch_shapes=[pltpu.VMEM((tile_n, f_in), jnp.float32)],
        compiler_params=pltpu.CompilerParams(
            dimension_semantics=("parallel", "arbitrary"),
            vmem_limit_bytes=32 * _MiB,
        ),
        cost_estimate=pl.CostEstimate(flops=flops, transcendentals=0,
                                      bytes_accessed=bytes_accessed),
    )(adj, h, w, b)


def _gcn_tiled(adj, x, weights, biases, *, tile_n=None, tile_k=None):
    n, d_in = x.shape
    d_out = weights[-1].shape[1]
    n_layers = len(weights)

    n_pad0 = _round_up(n, LANE)
    if tile_k is None:
        tile_k = min(512, n_pad0)
    if tile_n is None:
        tile_n = min(256, tile_k)
        if tile_k % tile_n:
            tile_n = LANE
    n_pad = _round_up(n, tile_k)

    adj_p = _pad2(adj, n_pad, n_pad, jnp.bfloat16)           # edge counts exact in bf16
    f_pads = [_round_up(f, LANE) for f in [d_in] + [w.shape[1] for w in weights]]

    h = _pad2(x, n_pad, f_pads[0], jnp.bfloat16)
    for l in range(n_layers):
        last = l == n_layers - 1
        w_p = _pad2(weights[l], f_pads[l], f_pads[l + 1], jnp.bfloat16)
        b_p = _pad2(biases[l], 1, f_pads[l + 1], jnp.float32)
        h = _gcn_layer_tiled(adj_p, h, w_p, b_p, relu=not last,
                             tile_n=tile_n, tile_k=tile_k,
                             out_dtype=jnp.float32 if last else jnp.bfloat16)
    return h[:n, :d_out]


def gcn_forward(adj, x, w_in, b_in, w_hid, b_hid, w_out, b_out, *,
                force_tiled=False, tile_n=None, tile_k=None):
    """adj: (N, N) dense aggregation matrix A[dst, src]; x: (N, D_in) node features.

    Weights are (in_features, out_features); biases are (1, out_features).
    Replicates gcn.forward: relu(L_in) -> relu(L_hid) -> relu(L_hid) -> L_out
    (the hidden layer's parameters are shared between the two middle applications).
    """
    weights = [w_in, w_hid, w_hid, w_out]
    biases = [b_in, b_hid, b_hid, b_out]

    n = x.shape[0]
    F = _round_up(max([x.shape[1]] + [w.shape[1] for w in weights]), LANE)
    n_pad = _round_up(n, LANE)
    fused_bytes = (n_pad * n_pad * 2          # adjacency, bf16
                   + 3 * n_pad * F * 2        # h0 + two feature scratch buffers, bf16
                   + n_pad * F * 4            # f32 output
                   + 4 * F * F * 2 + 4 * F * 4)
    if not force_tiled and fused_bytes <= _FUSED_VMEM_BUDGET:
        return _gcn_fused(adj, x, weights, biases)
    return _gcn_tiled(adj, x, weights, biases, tile_n=tile_n, tile_k=tile_k)


def gcn_reference(adj, x, w_in, b_in, w_hid, b_hid, w_out, b_out):
    h = jnp.maximum((adj @ x) @ w_in + b_in, 0.0)
    h = jnp.maximum((adj @ h) @ w_hid + b_hid, 0.0)
    h = jnp.maximum((adj @ h) @ w_hid + b_hid, 0.0)
    return (adj @ h) @ w_out + b_out


if __name__ == "__main__":
    N_NODES, D_IN, HIDDEN, D_OUT = 10, 16, 32, 8

    key = jax.random.PRNGKey(0)
    kx, kw1, kb1, kw2, kb2, kw3, kb3 = jax.random.split(key, 7)

    # Node features.
    x = jax.random.normal(kx, (N_NODES, D_IN), dtype=jnp.float32)

    # Small deterministic graph: self-loops + bidirectional ring.  A[dst, src] = 1 per edge.
    src, dst = [], []
    for v in range(N_NODES):
        u = (v + 1) % N_NODES
        src += [v, v, u]
        dst += [v, u, v]
    adj = jnp.zeros((N_NODES, N_NODES), jnp.float32).at[jnp.array(dst), jnp.array(src)].add(1.0)

    # Linear params, torch-style uniform(-1/sqrt(fan_in), 1/sqrt(fan_in)).
    def lin_init(kw, kb, fan_in, fan_out):
        bound = 1.0 / (fan_in ** 0.5)
        w = jax.random.uniform(kw, (fan_in, fan_out), jnp.float32, -bound, bound)
        b = jax.random.uniform(kb, (1, fan_out), jnp.float32, -bound, bound)
        return w, b

    w_in, b_in = lin_init(kw1, kb1, D_IN, HIDDEN)
    w_hid, b_hid = lin_init(kw2, kb2, HIDDEN, HIDDEN)
    w_out, b_out = lin_init(kw3, kb3, D_OUT and HIDDEN, D_OUT)

    # Default path: the small graph fits VMEM -> fused single-kernel forward.
    out_fused = gcn_forward(adj, x, w_in, b_in, w_hid, b_hid, w_out, b_out)
    out_fused = jax.block_until_ready(out_fused)

    # Also exercise the general K-tiled path with a multi-step parallel node grid.
    out_tiled = gcn_forward(adj, x, w_in, b_in, w_hid, b_hid, w_out, b_out,
                            force_tiled=True, tile_n=32)
    out_tiled = jax.block_until_ready(out_tiled)

    with jax.default_matmul_precision("highest"):
        ref = gcn_reference(adj, x, w_in, b_in, w_hid, b_hid, w_out, b_out)

    # bf16 operands (f32 accumulation) -> ~1% relative error through 4 layers.
    scale = float(jnp.max(jnp.abs(ref)))
    tol = 0.1 * scale + 0.05
    for name, out in (("fused", out_fused), ("tiled", out_tiled)):
        assert out.shape == (N_NODES, D_OUT), (name, out.shape)
        err = float(jnp.max(jnp.abs(out - ref)))
        assert err <= tol, (name, err, tol)

    print("KERNEL_OK")
</pallas_src>

<mosaic_0001>
module attributes {stable_mosaic.version = 11 : i64} {
  func.func @_gcn_fused_kernel(%arg0: memref<128x128xbf16, #tpu.memory_space<vmem>>, %arg1: memref<128x128xbf16, #tpu.memory_space<vmem>>, %arg2: memref<4x128x128xbf16, #tpu.memory_space<vmem>>, %arg3: memref<4x1x128xf32, #tpu.memory_space<vmem>>, %arg4: memref<128x128xf32, #tpu.memory_space<vmem>>, %arg5: memref<128x128xbf16, #tpu.memory_space<vmem>>, %arg6: memref<128x128xbf16, #tpu.memory_space<vmem>>) attributes {dimension_semantics = [], scalar_prefetch = 0 : i64, scratch_operands = 2 : i64, tpu.core_type = #tpu.core_type<tc>} {
    %c0 = arith.constant 0 : index
    %c0_0 = arith.constant 0 : index
    %0 = vector.load %arg1[%c0, %c0_0] : memref<128x128xbf16, #tpu.memory_space<vmem>>, vector<128x128xbf16>
    %c0_1 = arith.constant 0 : index
    %c0_2 = arith.constant 0 : index
    %1 = vector.load %arg5[%c0_1, %c0_2] : memref<128x128xbf16, #tpu.memory_space<vmem>>, vector<128x128xbf16>
    tpu.vector_store %arg5[%c0_1, %c0_2], %0 {strides = array<i32>} : memref<128x128xbf16, #tpu.memory_space<vmem>>, vector<128x128xbf16>,
    %c0_3 = arith.constant 0 : index
    %c0_4 = arith.constant 0 : index
    %2 = vector.load %arg0[%c0_3, %c0_4] : memref<128x128xbf16, #tpu.memory_space<vmem>>, vector<128x128xbf16>
    %c0_5 = arith.constant 0 : index
    %c0_6 = arith.constant 0 : index
    %3 = vector.load %arg5[%c0_5, %c0_6] : memref<128x128xbf16, #tpu.memory_space<vmem>>, vector<128x128xbf16>
    %cst = arith.constant dense<0.000000e+00> : vector<128x128xf32>
    %4 = tpu.matmul %2, %3, %cst {dimension_numbers = #tpu.dot_dimension_numbers<[1], [0], [0], [1], [0, 0, 1, 1], [], []>} : vector<128x128xbf16>, vector<128x128xbf16>, vector<128x128xf32> -> vector<128x128xf32>
    %5 = arith.truncf %4 : vector<128x128xf32> to vector<128x128xbf16>
    %c0_7 = arith.constant 0 : index
    %c0_8 = arith.constant 0 : index
    %c0_9 = arith.constant 0 : index
    %6 = vector.load %arg2[%c0_7, %c0_8, %c0_9] : memref<4x128x128xbf16, #tpu.memory_space<vmem>>, vector<1x128x128xbf16>
    %7 = vector.shape_cast %6 : vector<1x128x128xbf16> to vector<128x128xbf16>
    %cst_10 = arith.constant dense<0.000000e+00> : vector<128x128xf32>
    %8 = tpu.matmul %5, %7, %cst_10 {dimension_numbers = #tpu.dot_dimension_numbers<[1], [0], [0], [1], [0, 0, 1, 1], [], []>} : vector<128x128xbf16>, vector<128x128xbf16>, vector<128x128xf32> -> vector<128x128xf32>
    %c0_11 = arith.constant 0 : index
    %c0_12 = arith.constant 0 : index
    %c0_13 = arith.constant 0 : index
    %9 = vector.load %arg3[%c0_11, %c0_12, %c0_13] : memref<4x1x128xf32, #tpu.memory_space<vmem>>, vector<1x1x128xf32>
    %10 = vector.shape_cast %9 : vector<1x1x128xf32> to vector<1x128xf32>
    %11 = vector.broadcast %10 : vector<1x128xf32> to vector<128x128xf32>
    %12 = arith.addf %8, %11 : vector<128x128xf32>
    %cst_14 = arith.constant 0.000000e+00 : f32
    %13 = vector.broadcast %cst_14 : f32 to vector<128x128xf32>
    %14 = arith.maximumf %12, %13 : vector<128x128xf32>
    %15 = arith.truncf %14 : vector<128x128xf32> to vector<128x128xbf16>
    %c0_15 = arith.constant 0 : index
    %c0_16 = arith.constant 0 : index
    %16 = vector.load %arg6[%c0_15, %c0_16] : memref<128x128xbf16, #tpu.memory_space<vmem>>, vector<128x128xbf16>
    tpu.vector_store %arg6[%c0_15, %c0_16], %15 {strides = array<i32>} : memref<128x128xbf16, #tpu.memory_space<vmem>>, vector<128x128xbf16>,
    %c0_17 = arith.constant 0 : index
    %c0_18 = arith.constant 0 : index
    %17 = vector.load %arg0[%c0_17, %c0_18] : memref<128x128xbf16, #tpu.memory_space<vmem>>, vector<128x128xbf16>
    %c0_19 = arith.constant 0 : index
    %c0_20 = arith.constant 0 : index
    %18 = vector.load %arg6[%c0_19, %c0_20] : memref<128x128xbf16, #tpu.memory_space<vmem>>, vector<128x128xbf16>
    %cst_21 = arith.constant dense<0.000000e+00> : vector<128x128xf32>
    %19 = tpu.matmul %17, %18, %cst_21 {dimension_numbers = #tpu.dot_dimension_numbers<[1], [0], [0], [1], [0, 0, 1, 1], [], []>} : vector<128x128xbf16>, vector<128x128xbf16>, vector<128x128xf32> -> vector<128x128xf32>
    %20 = arith.truncf %19 : vector<128x128xf32> to vector<128x128xbf16>
    %c1 = arith.constant 1 : index
    %c0_22 = arith.constant 0 : index
    %c0_23 = arith.constant 0 : index
    %21 = vector.load %arg2[%c1, %c0_22, %c0_23] : memref<4x128x128xbf16, #tpu.memory_space<vmem>>, vector<1x128x128xbf16>
    %22 = vector.shape_cast %21 : vector<1x128x128xbf16> to vector<128x128xbf16>
    %cst_24 = arith.constant dense<0.000000e+00> : vector<128x128xf32>
    %23 = tpu.matmul %20, %22, %cst_24 {dimension_numbers = #tpu.dot_dimension_numbers<[1], [0], [0], [1], [0, 0, 1, 1], [], []>} : vector<128x128xbf16>, vector<128x128xbf16>, vector<128x128xf32> -> vector<128x128xf32>
    %c1_25 = arith.constant 1 : index
    %c0_26 = arith.constant 0 : index
    %c0_27 = arith.constant 0 : index
    %24 = vector.load %arg3[%c1_25, %c0_26, %c0_27] : memref<4x1x128xf32, #tpu.memory_space<vmem>>, vector<1x1x128xf32>
    %25 = vector.shape_cast %24 : vector<1x1x128xf32> to vector<1x128xf32>
    %26 = vector.broadcast %25 : vector<1x128xf32> to vector<128x128xf32>
    %27 = arith.addf %23, %26 : vector<128x128xf32>
    %cst_28 = arith.constant 0.000000e+00 : f32
    %28 = vector.broadcast %cst_28 : f32 to vector<128x128xf32>
    %29 = arith.maximumf %27, %28 : vector<128x128xf32>
    %30 = arith.truncf %29 : vector<128x128xf32> to vector<128x128xbf16>
    %c0_29 = arith.constant 0 : index
    %c0_30 = arith.constant 0 : index
    %31 = vector.load %arg5[%c0_29, %c0_30] : memref<128x128xbf16, #tpu.memory_space<vmem>>, vector<128x128xbf16>
    tpu.vector_store %arg5[%c0_29, %c0_30], %30 {strides = array<i32>} : memref<128x128xbf16, #tpu.memory_space<vmem>>, vector<128x128xbf16>,
    %c0_31 = arith.constant 0 : index
    %c0_32 = arith.constant 0 : index
    %32 = vector.load %arg0[%c0_31, %c0_32] : memref<128x128xbf16, #tpu.memory_space<vmem>>, vector<128x128xbf16>
    %c0_33 = arith.constant 0 : index
    %c0_34 = arith.constant 0 : index
    %33 = vector.load %arg5[%c0_33, %c0_34] : memref<128x128xbf16, #tpu.memory_space<vmem>>, vector<128x128xbf16>
    %cst_35 = arith.constant dense<0.000000e+00> : vector<128x128xf32>
    %34 = tpu.matmul %32, %33, %cst_35 {dimension_numbers = #tpu.dot_dimension_numbers<[1], [0], [0], [1], [0, 0, 1, 1], [], []>} : vector<128x128xbf16>, vector<128x128xbf16>, vector<128x128xf32> -> vector<128x128xf32>
    %35 = arith.truncf %34 : vector<128x128xf32> to vector<128x128xbf16>
    %c2 = arith.constant 2 : index
    %c0_36 = arith.constant 0 : index
    %c0_37 = arith.constant 0 : index
    %36 = vector.load %arg2[%c2, %c0_36, %c0_37] : memref<4x128x128xbf16, #tpu.memory_space<vmem>>, vector<1x128x128xbf16>
    %37 = vector.shape_cast %36 : vector<1x128x128xbf16> to vector<128x128xbf16>
    %cst_38 = arith.constant dense<0.000000e+00> : vector<128x128xf32>
    %38 = tpu.matmul %35, %37, %cst_38 {dimension_numbers = #tpu.dot_dimension_numbers<[1], [0], [0], [1], [0, 0, 1, 1], [], []>} : vector<128x128xbf16>, vector<128x128xbf16>, vector<128x128xf32> -> vector<128x128xf32>
    %c2_39 = arith.constant 2 : index
    %c0_40 = arith.constant 0 : index
    %c0_41 = arith.constant 0 : index
    %39 = vector.load %arg3[%c2_39, %c0_40, %c0_41] : memref<4x1x128xf32, #tpu.memory_space<vmem>>, vector<1x1x128xf32>
    %40 = vector.shape_cast %39 : vector<1x1x128xf32> to vector<1x128xf32>
    %41 = vector.broadcast %40 : vector<1x128xf32> to vector<128x128xf32>
    %42 = arith.addf %38, %41 : vector<128x128xf32>
    %cst_42 = arith.constant 0.000000e+00 : f32
    %43 = vector.broadcast %cst_42 : f32 to vector<128x128xf32>
    %44 = arith.maximumf %42, %43 : vector<128x128xf32>
    %45 = arith.truncf %44 : vector<128x128xf32> to vector<128x128xbf16>
    %c0_43 = arith.constant 0 : index
    %c0_44 = arith.constant 0 : index
    %46 = vector.load %arg6[%c0_43, %c0_44] : memref<128x128xbf16, #tpu.memory_space<vmem>>, vector<128x128xbf16>
    tpu.vector_store %arg6[%c0_43, %c0_44], %45 {strides = array<i32>} : memref<128x128xbf16, #tpu.memory_space<vmem>>, vector<128x128xbf16>,
    %c0_45 = arith.constant 0 : index
    %c0_46 = arith.constant 0 : index
    %47 = vector.load %arg0[%c0_45, %c0_46] : memref<128x128xbf16, #tpu.memory_space<vmem>>, vector<128x128xbf16>
    %c0_47 = arith.constant 0 : index
    %c0_48 = arith.constant 0 : index
    %48 = vector.load %arg6[%c0_47, %c0_48] : memref<128x128xbf16, #tpu.memory_space<vmem>>, vector<128x128xbf16>
    %cst_49 = arith.constant dense<0.000000e+00> : vector<128x128xf32>
    %49 = tpu.matmul %47, %48, %cst_49 {dimension_numbers = #tpu.dot_dimension_numbers<[1], [0], [0], [1], [0, 0, 1, 1], [], []>} : vector<128x128xbf16>, vector<128x128xbf16>, vector<128x128xf32> -> vector<128x128xf32>
    %50 = arith.truncf %49 : vector<128x128xf32> to vector<128x128xbf16>
    %c3 = arith.constant 3 : index
    %c0_50 = arith.constant 0 : index
    %c0_51 = arith.constant 0 : index
    %51 = vector.load %arg2[%c3, %c0_50, %c0_51] : memref<4x128x128xbf16, #tpu.memory_space<vmem>>, vector<1x128x128xbf16>
    %52 = vector.shape_cast %51 : vector<1x128x128xbf16> to vector<128x128xbf16>
    %cst_52 = arith.constant dense<0.000000e+00> : vector<128x128xf32>
    %53 = tpu.matmul %50, %52, %cst_52 {dimension_numbers = #tpu.dot_dimension_numbers<[1], [0], [0], [1], [0, 0, 1, 1], [], []>} : vector<128x128xbf16>, vector<128x128xbf16>, vector<128x128xf32> -> vector<128x128xf32>
    %c3_53 = arith.constant 3 : index
    %c0_54 = arith.constant 0 : index
    %c0_55 = arith.constant 0 : index
    %54 = vector.load %arg3[%c3_53, %c0_54, %c0_55] : memref<4x1x128xf32, #tpu.memory_space<vmem>>, vector<1x1x128xf32>
    %55 = vector.shape_cast %54 : vector<1x1x128xf32> to vector<1x128xf32>
    %56 = vector.broadcast %55 : vector<1x128xf32> to vector<128x128xf32>
    %57 = arith.addf %53, %56 : vector<128x128xf32>
    %c0_56 = arith.constant 0 : index
    %c0_57 = arith.constant 0 : index
    %58 = vector.load %arg4[%c0_56, %c0_57] : memref<128x128xf32, #tpu.memory_space<vmem>>, vector<128x128xf32>
    tpu.vector_store %arg4[%c0_56, %c0_57], %57 {strides = array<i32>} : memref<128x128xf32, #tpu.memory_space<vmem>>, vector<128x128xf32>,
    return
  }
}

</mosaic_0001>

<llo_original>
// kernel: tpu_custom_call.1
$region0: #{tpu_custom_call.1}
  #allocation0 [shape = 'u32[]', space=smem, size = 0x4, offset = 0x4, fixed_abs, tag = 'smem constant byte address 0x4 - core index']
  #allocation1 [shape = 'u32[144,128]{1,0:T(1,128)}', space=vmem, size = 0x12000, scoped, tag = 'internal scratch']
  #allocation2 [shape = 'bf16[128,128]{1,0:T(8,128)(2,1)}', space=vmem, size = 0x8000, scoped, tag = 'scratch operand']
  #allocation3 [shape = 'bf16[128,128]{1,0:T(8,128)(2,1)}', space=vmem, size = 0x8000, scoped, tag = 'scratch operand']
  %s0 = inlined_call_operand.hbm [shape: bf16[128,128], index: 0, kind: input, shape index: {}]
  %s1 = inlined_call_operand.hbm [shape: bf16[128,128], index: 1, kind: input, shape index: {}]
  %s2 = inlined_call_operand.hbm [shape: bf16[4,128,128], index: 2, kind: input, shape index: {}]
  %s3 = inlined_call_operand.vmem [shape: f32[4,1,128], index: 3, kind: input, shape index: {}]
  %s4 = inlined_call_operand.hbm [shape: f32[128,128], index: 4, kind: output, shape index: {}]
  %s5 = sld [smem:[#allocation0]]
  $region38: #{tpu_custom_call.1} parent=0
    _
  %s7 = ssub.s32 1, %s5
  %s8 = scalar_select 0, %s7, %s5
  $region1: #{tpu_custom_call.1} parent=0
    #allocation4 [shape = 'u8[32768]{0}', space=vmem, size = 0x8000, scoped, tag = 'input window, operand 0, single buffered']
    #allocation5 [shape = 's32[1]{0}', space=sflag, size = 0x4, scoped, tag = 'scoped memory for tpu_custom_call.1']
    #allocation6 [shape = 's32[1]{0}', space=sflag, size = 0x4, scoped, tag = 'scoped memory for tpu_custom_call.1']
    #allocation7 [shape = 'u8[32768]{0}', space=vmem, size = 0x8000, scoped, tag = 'input window, operand 1, single buffered']
    #allocation8 [shape = 's32[1]{0}', space=sflag, size = 0x4, scoped, tag = 'scoped memory for tpu_custom_call.1']
    #allocation9 [shape = 'u8[131072]{0}', space=vmem, size = 0x20000, scoped, tag = 'input window, operand 2, single buffered']
    #allocation10 [shape = 'u8[65536]{0}', space=vmem, size = 0x10000, scoped, tag = 'output window, operand 0, single buffered']
    %9 = vsyncpa [#allocation5], 0
    %10 = vsyncpa [#allocation8], 0
    %11 = vsyncpa [#allocation6], 0
    // Predicated region
    $region2: #{tpu_custom_call.1} parent=1 // pred_check
      _
    $region3: #{tpu_custom_call.1} parent=1 // pred_check_branch
      %13 = sbr.rel (0) target = $region5
    $region4: #{tpu_custom_call.1} parent=1 // pred_region
      %s15 = ssub.s32 1024, 1024
      %16 = vsyncadd [#allocation5], %s15
      %s17 = sshll.u32 [#allocation4], 4
      %s18 = int_to_ptr.vmem [resolvable:$true] %s17
      %23 = dma.hbm_to_vmem [thread:$0]  %s0, 1024, %s18, [#allocation5], 64, 64, 4
    $region5: #{tpu_custom_call.1} parent=1 // pred_fallthru
      _
    // Predicated region
    $region6: #{tpu_custom_call.1} parent=1 // pred_check
      _
    $region7: #{tpu_custom_call.1} parent=1 // pred_check_branch
      %25 = sbr.rel (0) target = $region9
    $region8: #{tpu_custom_call.1} parent=1 // pred_region
      %s27 = ssub.s32 1024, 1024
      %28 = vsyncadd [#allocation8], %s27
      %s29 = sshll.u32 [#allocation7], 4
      %s30 = int_to_ptr.vmem [resolvable:$true] %s29
      %35 = dma.hbm_to_vmem [thread:$0]  %s1, 1024, %s30, [#allocation8], 64, 64, 4
    $region9: #{tpu_custom_call.1} parent=1 // pred_fallthru
      _
    // Predicated region
    $region10: #{tpu_custom_call.1} parent=1 // pred_check
      _
    $region11: #{tpu_custom_call.1} parent=1 // pred_check_branch
      %37 = sbr.rel (0) target = $region13
    $region12: #{tpu_custom_call.1} parent=1 // pred_region
      %s39 = ssub.s32 4096, 4096
      %40 = vsyncadd [#allocation8], %s39
      %s41 = sshll.u32 [#allocation9], 4
      %s42 = int_to_ptr.vmem [resolvable:$true] %s41
      %47 = dma.hbm_to_vmem [thread:$0]  %s2, 4096, %s42, [#allocation8], 64, 64, 4
    $region13: #{tpu_custom_call.1} parent=1 // pred_fallthru
      _
    // Predicated region
    $region14: #{tpu_custom_call.1} parent=1 // pred_check
      _
    $region15: #{tpu_custom_call.1} parent=1 // pred_check_branch
      %49 = sbr.rel (0) target = $region17
    $region16: #{tpu_custom_call.1} parent=1 // pred_region
      _
    $region17: #{tpu_custom_call.1} parent=1 // pred_fallthru
      _
    // Predicated region
    $region18: #{tpu_custom_call.1} parent=1 // pred_check
      _
    $region19: #{tpu_custom_call.1} parent=1 // pred_check_branch
      %51 = sbr.rel (0) target = $region21
    $region20: #{tpu_custom_call.1} parent=1 // pred_region
      %52 = dma.done [#allocation5], 1024
    $region21: #{tpu_custom_call.1} parent=1 // pred_fallthru
      _
    // Predicated region
    $region22: #{tpu_custom_call.1} parent=1 // pred_check
      _
    $region23: #{tpu_custom_call.1} parent=1 // pred_check_branch
      %54 = sbr.rel (0) target = $region25
    $region24: #{tpu_custom_call.1} parent=1 // pred_region
      %55 = dma.done [#allocation8], 1024
    $region25: #{tpu_custom_call.1} parent=1 // pred_fallthru
      _
    // Predicated region
    $region26: #{tpu_custom_call.1} parent=1 // pred_check
      _
    $region27: #{tpu_custom_call.1} parent=1 // pred_check_branch
      %57 = sbr.rel (0) target = $region29
    $region28: #{tpu_custom_call.1} parent=1 // pred_region
      %58 = dma.done [#allocation8], 4096
    $region29: #{tpu_custom_call.1} parent=1 // pred_fallthru
      _
    %v60 = vld [vmem:[#allocation7] sm:$0xf]
    %v61 = vld [vmem:[#allocation7 + $0x4] sm:$0xf]
    %v62 = vld [vmem:[#allocation7 + $0x8] sm:$0xf]
    %v63 = vld [vmem:[#allocation7 + $0xc] sm:$0xf]
    %v64 = vld [vmem:[#allocation7 + $0x10] sm:$0xf]
    %v65 = vld [vmem:[#allocation7 + $0x14] sm:$0xf]
    %v66 = vld [vmem:[#allocation7 + $0x18] sm:$0xf]
    %v67 = vld [vmem:[#allocation7 + $0x1c] sm:$0xf]
    %v68 = vld [vmem:[#allocation7 + $0x20] sm:$0xf]
    %v69 = vld [vmem:[#allocation7 + $0x24] sm:$0xf]
    %v70 = vld [vmem:[#allocation7 + $0x28] sm:$0xf]
    %v71 = vld [vmem:[#allocation7 + $0x2c] sm:$0xf]
    %v72 = vld [vmem:[#allocation7 + $0x30] sm:$0xf]
    %v73 = vld [vmem:[#allocation7 + $0x34] sm:$0xf]
    %v74 = vld [vmem:[#allocation7 + $0x38] sm:$0xf]
    %v75 = vld [vmem:[#allocation7 + $0x3c] sm:$0xf]
    %76 = vst [vmem:[#allocation2] sm:$0xf] %v60
    %77 = vst [vmem:[#allocation2 + $0x4] sm:$0xf] %v61
    %78 = vst [vmem:[#allocation2 + $0x8] sm:$0xf] %v62
    %79 = vst [vmem:[#allocation2 + $0xc] sm:$0xf] %v63
    %80 = vst [vmem:[#allocation2 + $0x10] sm:$0xf] %v64
    %81 = vst [vmem:[#allocation2 + $0x14] sm:$0xf] %v65
    %82 = vst [vmem:[#allocation2 + $0x18] sm:$0xf] %v66
    %83 = vst [vmem:[#allocation2 + $0x1c] sm:$0xf] %v67
    %84 = vst [vmem:[#allocation2 + $0x20] sm:$0xf] %v68
    %85 = vst [vmem:[#allocation2 + $0x24] sm:$0xf] %v69
    %86 = vst [vmem:[#allocation2 + $0x28] sm:$0xf] %v70
    %87 = vst [vmem:[#allocation2 + $0x2c] sm:$0xf] %v71
    %88 = vst [vmem:[#allocation2 + $0x30] sm:$0xf] %v72
    %89 = vst [vmem:[#allocation2 + $0x34] sm:$0xf] %v73
    %90 = vst [vmem:[#allocation2 + $0x38] sm:$0xf] %v74
    %91 = vst [vmem:[#allocation2 + $0x3c] sm:$0xf] %v75
    %v92 = vld [vmem:[#allocation4] sm:$0xf]
    %v93 = vld [vmem:[#allocation4 + $0x4] sm:$0xf]
    %v94 = vld [vmem:[#allocation4 + $0x8] sm:$0xf]
    %v95 = vld [vmem:[#allocation4 + $0xc] sm:$0xf]
    %v96 = vld [vmem:[#allocation4 + $0x10] sm:$0xf]
    %v97 = vld [vmem:[#allocation4 + $0x14] sm:$0xf]
    %v98 = vld [vmem:[#allocation4 + $0x18] sm:$0xf]
    %v99 = vld [vmem:[#allocation4 + $0x1c] sm:$0xf]
    %v100 = vld [vmem:[#allocation4 + $0x20] sm:$0xf]
    %v101 = vld [vmem:[#allocation4 + $0x24] sm:$0xf]
    %v102 = vld [vmem:[#allocation4 + $0x28] sm:$0xf]
    %v103 = vld [vmem:[#allocation4 + $0x2c] sm:$0xf]
    %v104 = vld [vmem:[#allocation4 + $0x30] sm:$0xf]
    %v105 = vld [vmem:[#allocation4 + $0x34] sm:$0xf]
    %v106 = vld [vmem:[#allocation4 + $0x38] sm:$0xf]
    %v107 = vld [vmem:[#allocation4 + $0x3c] sm:$0xf]
    %v108 = vld [vmem:[#allocation2] sm:$0xf]
    %v109 = vld [vmem:[#allocation2 + $0x4] sm:$0xf]
    %v110 = vld [vmem:[#allocation2 + $0x8] sm:$0xf]
    %v111 = vld [vmem:[#allocation2 + $0xc] sm:$0xf]
    %v112 = vld [vmem:[#allocation2 + $0x10] sm:$0xf]
    %v113 = vld [vmem:[#allocation2 + $0x14] sm:$0xf]
    %v114 = vld [vmem:[#allocation2 + $0x18] sm:$0xf]
    %v115 = vld [vmem:[#allocation2 + $0x1c] sm:$0xf]
    %v116 = vld [vmem:[#allocation2 + $0x20] sm:$0xf]
    %v117 = vld [vmem:[#allocation2 + $0x24] sm:$0xf]
    %v118 = vld [vmem:[#allocation2 + $0x28] sm:$0xf]
    %v119 = vld [vmem:[#allocation2 + $0x2c] sm:$0xf]
    %v120 = vld [vmem:[#allocation2 + $0x30] sm:$0xf]
    %v121 = vld [vmem:[#allocation2 + $0x34] sm:$0xf]
    %v122 = vld [vmem:[#allocation2 + $0x38] sm:$0xf]
    %v123 = vld [vmem:[#allocation2 + $0x3c] sm:$0xf]
    %v140 = vunpack.c.l.b16 %v92
    %v141 = vunpack.c.l.b16 %v93
    %v142 = vunpack.c.l.b16 %v94
    %v143 = vunpack.c.l.b16 %v95
    %v144 = vunpack.c.l.b16 %v96
    %v145 = vunpack.c.l.b16 %v97
    %v146 = vunpack.c.l.b16 %v98
    %v147 = vunpack.c.l.b16 %v99
    %v148 = vunpack.c.l.b16 %v100
    %v149 = vunpack.c.l.b16 %v101
    %v150 = vunpack.c.l.b16 %v102
    %v151 = vunpack.c.l.b16 %v103
    %v152 = vunpack.c.l.b16 %v104
    %v153 = vunpack.c.l.b16 %v105
    %v154 = vunpack.c.l.b16 %v106
    %v155 = vunpack.c.l.b16 %v107
    %v156 = vpack.c.b16 %v141, %v140
    %v157 = vpack.c.b16 %v143, %v142
    %v158 = vpack.c.b16 %v145, %v144
    %v159 = vpack.c.b16 %v147, %v146
    %v160 = vpack.c.b16 %v149, %v148
    %v161 = vpack.c.b16 %v151, %v150
    %v162 = vpack.c.b16 %v153, %v152
    %v163 = vpack.c.b16 %v155, %v154
    %v188 = vunpack.c.l.b16 %v108
    %v189 = vunpack.c.l.b16 %v109
    %v190 = vunpack.c.l.b16 %v110
    %v191 = vunpack.c.l.b16 %v111
    %v192 = vunpack.c.l.b16 %v112
    %v193 = vunpack.c.l.b16 %v113
    %v194 = vunpack.c.l.b16 %v114
    %v195 = vunpack.c.l.b16 %v115
    %v196 = vunpack.c.l.b16 %v116
    %v197 = vunpack.c.l.b16 %v117
    %v198 = vunpack.c.l.b16 %v118
    %v199 = vunpack.c.l.b16 %v119
    %v200 = vunpack.c.l.b16 %v120
    %v201 = vunpack.c.l.b16 %v121
    %v202 = vunpack.c.l.b16 %v122
    %v203 = vunpack.c.l.b16 %v123
    %v204 = vpack.c.b16 %v189, %v188
    %v205 = vpack.c.b16 %v191, %v190
    %v206 = vpack.c.b16 %v193, %v192
    %v207 = vpack.c.b16 %v195, %v194
    %v208 = vpack.c.b16 %v197, %v196
    %v209 = vpack.c.b16 %v199, %v198
    %v210 = vpack.c.b16 %v201, %v200
    %v211 = vpack.c.b16 %v203, %v202
    %220 = vmatprep.subr.bf16.mxu0 0
    %221 = vmatpush1.bf16.msra.mxu0 %v211
    %222 = vmatprep.subr.bf16.mxu0 0
    %223 = vmatpush1.bf16.msra.mxu0 %v210
    %224 = vmatprep.subr.bf16.mxu0 0
    %225 = vmatpush1.bf16.msra.mxu0 %v209
    %226 = vmatprep.subr.bf16.mxu0 0
    %227 = vmatpush1.bf16.msra.mxu0 %v208
    %228 = vmatprep.subr.bf16.mxu0 0
    %229 = vmatpush1.bf16.msra.mxu0 %v207
    %230 = vmatprep.subr.bf16.mxu0 0
    %231 = vmatpush1.bf16.msra.mxu0 %v206
    %232 = vmatprep.subr.bf16.mxu0 0
    %233 = vmatpush1.bf16.msra.mxu0 %v205
    %234 = vmatprep.subr.bf16.mxu0 0
    %235 = vmatpush1.bf16.msra.mxu0 %v204
    %236 = vmatprep.subr.bf16.mxu0 0
    %237 = vmatpush2.bf16.msra.mxu0 0
    %238 = vmatprep.subr.bf16.mxu0 0
    %239 = vmatpush2.bf16.msra.mxu0 0
    %240 = vmatprep.subr.bf16.mxu0 0
    %241 = vmatpush2.bf16.msra.mxu0 0
    %242 = vmatprep.subr.bf16.mxu0 0
    %243 = vmatpush2.bf16.msra.mxu0 0
    %244 = vmatprep.subr.bf16.mxu0 0
    %245 = vmatpush2.bf16.msra.mxu0 0
    %246 = vmatprep.subr.bf16.mxu0 0
    %247 = vmatpush2.bf16.msra.mxu0 0
    %248 = vmatprep.subr.bf16.mxu0 0
    %249 = vmatpush2.bf16.msra.mxu0 0
    %250 = vmatprep.subr.bf16.mxu0 0
    %251 = vmatpush2.bf16.msra.mxu0 0
    %252 = vmatprep.mubr.bf16.mxu0 0
    %253 = vmatmul.mubr.bf16.gmra.mxu0 %v156
    %v254 = vpop.f32.mrf.mxu0
    %v255 = vadd.f32 0.0, %v254
    %v256 = vpop.f32.mrf.mxu0
    %v257 = vpop.f32.mrf.mxu0
    %v258 = vadd.f32 0.0, %v257
    %v259 = vpop.f32.mrf.mxu0
    %260 = vmatprep.mubr.bf16.mxu0 0
    %261 = vmatmul.mubr.bf16.gmra.mxu0 %v157
    %v262 = vpop.f32.mrf.mxu0
    %v263 = vadd.f32 0.0, %v262
    %v264 = vpop.f32.mrf.mxu0
    %v265 = vpop.f32.mrf.mxu0
    %v266 = vadd.f32 0.0, %v265
    %v267 = vpop.f32.mrf.mxu0
    %268 = vmatprep.mubr.bf16.mxu0 0
    %269 = vmatmul.mubr.bf16.gmra.mxu0 %v158
    %v270 = vpop.f32.mrf.mxu0
    %v271 = vadd.f32 0.0, %v270
    %v272 = vpop.f32.mrf.mxu0
    %v273 = vpop.f32.mrf.mxu0
    %v274 = vadd.f32 0.0, %v273
    %v275 = vpop.f32.mrf.mxu0
    %276 = vmatprep.mubr.bf16.mxu0 0
    %277 = vmatmul.mubr.bf16.gmra.mxu0 %v159
    %v278 = vpop.f32.mrf.mxu0
    %v279 = vadd.f32 0.0, %v278
    %v280 = vpop.f32.mrf.mxu0
    %v281 = vpop.f32.mrf.mxu0
    %v282 = vadd.f32 0.0, %v281
    %v283 = vpop.f32.mrf.mxu0
    %284 = vmatprep.mubr.bf16.mxu0 0
    %285 = vmatmul.mubr.bf16.gmra.mxu0 %v160
    %v286 = vpop.f32.mrf.mxu0
    %v287 = vadd.f32 0.0, %v286
    %v288 = vpop.f32.mrf.mxu0
    %v289 = vpop.f32.mrf.mxu0
    %v290 = vadd.f32 0.0, %v289
    %v291 = vpop.f32.mrf.mxu0
    %292 = vmatprep.mubr.bf16.mxu0 0
    %293 = vmatmul.mubr.bf16.gmra.mxu0 %v161
    %v294 = vpop.f32.mrf.mxu0
    %v295 = vadd.f32 0.0, %v294
    %v296 = vpop.f32.mrf.mxu0
    %v297 = vpop.f32.mrf.mxu0
    %v298 = vadd.f32 0.0, %v297
    %v299 = vpop.f32.mrf.mxu0
    %300 = vmatprep.mubr.bf16.mxu0 0
    %301 = vmatmul.mubr.bf16.gmra.mxu0 %v162
    %v302 = vpop.f32.mrf.mxu0
    %v303 = vadd.f32 0.0, %v302
    %v304 = vpop.f32.mrf.mxu0
    %v305 = vpop.f32.mrf.mxu0
    %v306 = vadd.f32 0.0, %v305
    %v307 = vpop.f32.mrf.mxu0
    %308 = vmatprep.mubr.bf16.mxu0 0
    %309 = vmatmul.mubr.bf16.gmra.mxu0 %v163
    %v310 = vpop.f32.mrf.mxu0
    %v311 = vadd.f32 0.0, %v310
    %v312 = vpop.f32.mrf.mxu0
    %v313 = vpop.f32.mrf.mxu0
    %v314 = vadd.f32 0.0, %v313
    %v315 = vpop.f32.mrf.mxu0
    %316 = vdwg.mxu0
    %v317 = vpack.c.bf16 %v258, %v255
    %v318 = vpack.c.bf16 %v266, %v263
    %v319 = vpack.c.bf16 %v274, %v271
    %v320 = vpack.c.bf16 %v282, %v279
    %v321 = vpack.c.bf16 %v290, %v287
    %v322 = vpack.c.bf16 %v298, %v295
    %v323 = vpack.c.bf16 %v306, %v303
    %v324 = vpack.c.bf16 %v314, %v311
    %v325 = vld [vmem:[#allocation9] sm:$0xf]
    %v326 = vld [vmem:[#allocation9 + $0x4] sm:$0xf]
    %v327 = vld [vmem:[#allocation9 + $0x8] sm:$0xf]
    %v328 = vld [vmem:[#allocation9 + $0xc] sm:$0xf]
    %v329 = vld [vmem:[#allocation9 + $0x10] sm:$0xf]
    %v330 = vld [vmem:[#allocation9 + $0x14] sm:$0xf]
    %v331 = vld [vmem:[#allocation9 + $0x18] sm:$0xf]
    %v332 = vld [vmem:[#allocation9 + $0x1c] sm:$0xf]
    %v333 = vld [vmem:[#allocation9 + $0x20] sm:$0xf]
    %v334 = vld [vmem:[#allocation9 + $0x24] sm:$0xf]
    %v335 = vld [vmem:[#allocation9 + $0x28] sm:$0xf]
    %v336 = vld [vmem:[#allocation9 + $0x2c] sm:$0xf]
    %v337 = vld [vmem:[#allocation9 + $0x30] sm:$0xf]
    %v338 = vld [vmem:[#allocation9 + $0x34] sm:$0xf]
    %v339 = vld [vmem:[#allocation9 + $0x38] sm:$0xf]
    %v340 = vld [vmem:[#allocation9 + $0x3c] sm:$0xf]
    %v341 = vld [vmem:[%s3] sm:$0x1]
    %v343 = vlaneseq
    %v344 = vshrl.u32 %v343, 7
    %v345 = vsub.s32 0, %v344
    %v346 = vrot.slane %v341, %v345
    %v364 = vunpack.c.l.b16 %v325
    %v365 = vunpack.c.l.b16 %v326
    %v366 = vunpack.c.l.b16 %v327
    %v367 = vunpack.c.l.b16 %v328
    %v368 = vunpack.c.l.b16 %v329
    %v369 = vunpack.c.l.b16 %v330
    %v370 = vunpack.c.l.b16 %v331
    %v371 = vunpack.c.l.b16 %v332
    %v372 = vunpack.c.l.b16 %v333
    %v373 = vunpack.c.l.b16 %v334
    %v374 = vunpack.c.l.b16 %v335
    %v375 = vunpack.c.l.b16 %v336
    %v376 = vunpack.c.l.b16 %v337
    %v377 = vunpack.c.l.b16 %v338
    %v378 = vunpack.c.l.b16 %v339
    %v379 = vunpack.c.l.b16 %v340
    %v380 = vpack.c.b16 %v365, %v364
    %v381 = vpack.c.b16 %v367, %v366
    %v382 = vpack.c.b16 %v369, %v368
    %v383 = vpack.c.b16 %v371, %v370
    %v384 = vpack.c.b16 %v373, %v372
    %v385 = vpack.c.b16 %v375, %v374
    %v386 = vpack.c.b16 %v377, %v376
    %v387 = vpack.c.b16 %v379, %v378
    %396 = vmatprep.subr.bf16.mxu0 0
    %397 = vmatpush1.bf16.msra.mxu0 %v387
    %398 = vmatprep.subr.bf16.mxu0 0
    %399 = vmatpush1.bf16.msra.mxu0 %v386
    %400 = vmatprep.subr.bf16.mxu0 0
    %401 = vmatpush1.bf16.msra.mxu0 %v385
    %402 = vmatprep.subr.bf16.mxu0 0
    %403 = vmatpush1.bf16.msra.mxu0 %v384
    %404 = vmatprep.subr.bf16.mxu0 0
    %405 = vmatpush1.bf16.msra.mxu0 %v383
    %406 = vmatprep.subr.bf16.mxu0 0
    %407 = vmatpush1.bf16.msra.mxu0 %v382
    %408 = vmatprep.subr.bf16.mxu0 0
    %409 = vmatpush1.bf16.msra.mxu0 %v381
    %410 = vmatprep.subr.bf16.mxu0 0
    %411 = vmatpush1.bf16.msra.mxu0 %v380
    %412 = vmatprep.subr.bf16.mxu0 0
    %413 = vmatpush2.bf16.msra.mxu0 0
    %414 = vmatprep.subr.bf16.mxu0 0
    %415 = vmatpush2.bf16.msra.mxu0 0
    %416 = vmatprep.subr.bf16.mxu0 0
    %417 = vmatpush2.bf16.msra.mxu0 0
    %418 = vmatprep.subr.bf16.mxu0 0
    %419 = vmatpush2.bf16.msra.mxu0 0
    %420 = vmatprep.subr.bf16.mxu0 0
    %421 = vmatpush2.bf16.msra.mxu0 0
    %422 = vmatprep.subr.bf16.mxu0 0
    %423 = vmatpush2.bf16.msra.mxu0 0
    %424 = vmatprep.subr.bf16.mxu0 0
    %425 = vmatpush2.bf16.msra.mxu0 0
    %426 = vmatprep.subr.bf16.mxu0 0
    %427 = vmatpush2.bf16.msra.mxu0 0
    %428 = vmatprep.mubr.bf16.mxu0 0
    %429 = vmatmul.mubr.bf16.gmra.mxu0 %v317
    %v430 = vpop.f32.mrf.mxu0
    %v431 = vadd.f32 %v346, %v430
    %v432 = vpop.f32.mrf.mxu0
    %v433 = vpop.f32.mrf.mxu0
    %v434 = vadd.f32 %v346, %v433
    %v435 = vpop.f32.mrf.mxu0
    %436 = vmatprep.mubr.bf16.mxu0 0
    %437 = vmatmul.mubr.bf16.gmra.mxu0 %v318
    %v438 = vpop.f32.mrf.mxu0
    %v439 = vadd.f32 %v346, %v438
    %v440 = vpop.f32.mrf.mxu0
    %v441 = vpop.f32.mrf.mxu0
    %v442 = vadd.f32 %v346, %v441
    %v443 = vpop.f32.mrf.mxu0
    %444 = vmatprep.mubr.bf16.mxu0 0
    %445 = vmatmul.mubr.bf16.gmra.mxu0 %v319
    %v446 = vpop.f32.mrf.mxu0
    %v447 = vadd.f32 %v346, %v446
    %v448 = vpop.f32.mrf.mxu0
    %v449 = vpop.f32.mrf.mxu0
    %v450 = vadd.f32 %v346, %v449
    %v451 = vpop.f32.mrf.mxu0
    %452 = vmatprep.mubr.bf16.mxu0 0
    %453 = vmatmul.mubr.bf16.gmra.mxu0 %v320
    %v454 = vpop.f32.mrf.mxu0
    %v455 = vadd.f32 %v346, %v454
    %v456 = vpop.f32.mrf.mxu0
    %v457 = vpop.f32.mrf.mxu0
    %v458 = vadd.f32 %v346, %v457
    %v459 = vpop.f32.mrf.mxu0
    %460 = vmatprep.mubr.bf16.mxu0 0
    %461 = vmatmul.mubr.bf16.gmra.mxu0 %v321
    %v462 = vpop.f32.mrf.mxu0
    %v463 = vadd.f32 %v346, %v462
    %v464 = vpop.f32.mrf.mxu0
    %v465 = vpop.f32.mrf.mxu0
    %v466 = vadd.f32 %v346, %v465
    %v467 = vpop.f32.mrf.mxu0
    %468 = vmatprep.mubr.bf16.mxu0 0
    %469 = vmatmul.mubr.bf16.gmra.mxu0 %v322
    %v470 = vpop.f32.mrf.mxu0
    %v471 = vadd.f32 %v346, %v470
    %v472 = vpop.f32.mrf.mxu0
    %v473 = vpop.f32.mrf.mxu0
    %v474 = vadd.f32 %v346, %v473
    %v475 = vpop.f32.mrf.mxu0
    %476 = vmatprep.mubr.bf16.mxu0 0
    %477 = vmatmul.mubr.bf16.gmra.mxu0 %v323
    %v478 = vpop.f32.mrf.mxu0
    %v479 = vadd.f32 %v346, %v478
    %v480 = vpop.f32.mrf.mxu0
    %v481 = vpop.f32.mrf.mxu0
    %v482 = vadd.f32 %v346, %v481
    %v483 = vpop.f32.mrf.mxu0
    %484 = vmatprep.mubr.bf16.mxu0 0
    %485 = vmatmul.mubr.bf16.gmra.mxu0 %v324
    %v486 = vpop.f32.mrf.mxu0
    %v487 = vadd.f32 %v346, %v486
    %v488 = vpop.f32.mrf.mxu0
    %v489 = vpop.f32.mrf.mxu0
    %v490 = vadd.f32 %v346, %v489
    %v491 = vpop.f32.mrf.mxu0
    %492 = vdwg.mxu0
    %v493 = vmax.f32 %v431, 0.0
    %v494 = vmax.f32 %v434, 0.0
    %v495 = vmax.f32 %v439, 0.0
    %v496 = vmax.f32 %v442, 0.0
    %v497 = vmax.f32 %v447, 0.0
    %v498 = vmax.f32 %v450, 0.0
    %v499 = vmax.f32 %v455, 0.0
    %v500 = vmax.f32 %v458, 0.0
    %v501 = vmax.f32 %v463, 0.0
    %v502 = vmax.f32 %v466, 0.0
    %v503 = vmax.f32 %v471, 0.0
    %v504 = vmax.f32 %v474, 0.0
    %v505 = vmax.f32 %v479, 0.0
    %v506 = vmax.f32 %v482, 0.0
    %v507 = vmax.f32 %v487, 0.0
    %v508 = vmax.f32 %v490, 0.0
    %v509 = vpack.c.bf16 %v494, %v493
    %v510 = vpack.c.bf16 %v496, %v495
    %v511 = vpack.c.bf16 %v498, %v497
    %v512 = vpack.c.bf16 %v500, %v499
    %v513 = vpack.c.bf16 %v502, %v501
    %v514 = vpack.c.bf16 %v504, %v503
    %v515 = vpack.c.bf16 %v506, %v505
    %v516 = vpack.c.bf16 %v508, %v507
    %v525 = vunpack.c.l.b16 %v509
    %v526 = vunpack.c.h.b16 %v509
    %v527 = vunpack.c.l.b16 %v510
    %v528 = vunpack.c.h.b16 %v510
    %v529 = vunpack.c.l.b16 %v511
    %v530 = vunpack.c.h.b16 %v511
    %v531 = vunpack.c.l.b16 %v512
    %v532 = vunpack.c.h.b16 %v512
    %v533 = vunpack.c.l.b16 %v513
    %v534 = vunpack.c.h.b16 %v513
    %v535 = vunpack.c.l.b16 %v514
    %v536 = vunpack.c.h.b16 %v514
    %v537 = vunpack.c.l.b16 %v515
    %v538 = vunpack.c.h.b16 %v515
    %v539 = vunpack.c.l.b16 %v516
    %v540 = vunpack.c.h.b16 %v516
    %v541 = vpack.c.b16 %v525, %v525
    %v542 = vpack.c.b16 %v526, %v526
    %v543 = vpack.c.b16 %v527, %v527
    %v544 = vpack.c.b16 %v528, %v528
    %v545 = vpack.c.b16 %v529, %v529
    %v546 = vpack.c.b16 %v530, %v530
    %v547 = vpack.c.b16 %v531, %v531
    %v548 = vpack.c.b16 %v532, %v532
    %v549 = vpack.c.b16 %v533, %v533
    %v550 = vpack.c.b16 %v534, %v534
    %v551 = vpack.c.b16 %v535, %v535
    %v552 = vpack.c.b16 %v536, %v536
    %v553 = vpack.c.b16 %v537, %v537
    %v554 = vpack.c.b16 %v538, %v538
    %v555 = vpack.c.b16 %v539, %v539
    %v556 = vpack.c.b16 %v540, %v540
    %573 = vst [vmem:[#allocation3] sm:$0xf] %v541
    %574 = vst [vmem:[#allocation3 + $0x4] sm:$0xf] %v542
    %575 = vst [vmem:[#allocation3 + $0x8] sm:$0xf] %v543
    %576 = vst [vmem:[#allocation3 + $0xc] sm:$0xf] %v544
    %577 = vst [vmem:[#allocation3 + $0x10] sm:$0xf] %v545
    %578 = vst [vmem:[#allocation3 + $0x14] sm:$0xf] %v546
    %579 = vst [vmem:[#allocation3 + $0x18] sm:$0xf] %v547
    %580 = vst [vmem:[#allocation3 + $0x1c] sm:$0xf] %v548
    %581 = vst [vmem:[#allocation3 + $0x20] sm:$0xf] %v549
    %582 = vst [vmem:[#allocation3 + $0x24] sm:$0xf] %v550
    %583 = vst [vmem:[#allocation3 + $0x28] sm:$0xf] %v551
    %584 = vst [vmem:[#allocation3 + $0x2c] sm:$0xf] %v552
    %585 = vst [vmem:[#allocation3 + $0x30] sm:$0xf] %v553
    %586 = vst [vmem:[#allocation3 + $0x34] sm:$0xf] %v554
    %587 = vst [vmem:[#allocation3 + $0x38] sm:$0xf] %v555
    %588 = vst [vmem:[#allocation3 + $0x3c] sm:$0xf] %v556
    %v589 = vld [vmem:[#allocation4] sm:$0xf]
    %v590 = vld [vmem:[#allocation4 + $0x4] sm:$0xf]
    %v591 = vld [vmem:[#allocation4 + $0x8] sm:$0xf]
    %v592 = vld [vmem:[#allocation4 + $0xc] sm:$0xf]
    %v593 = vld [vmem:[#allocation4 + $0x10] sm:$0xf]
    %v594 = vld [vmem:[#allocation4 + $0x14] sm:$0xf]
    %v595 = vld [vmem:[#allocation4 + $0x18] sm:$0xf]
    %v596 = vld [vmem:[#allocation4 + $0x1c] sm:$0xf]
    %v597 = vld [vmem:[#allocation4 + $0x20] sm:$0xf]
    %v598 = vld [vmem:[#allocation4 + $0x24] sm:$0xf]
    %v599 = vld [vmem:[#allocation4 + $0x28] sm:$0xf]
    %v600 = vld [vmem:[#allocation4 + $0x2c] sm:$0xf]
    %v601 = vld [vmem:[#allocation4 + $0x30] sm:$0xf]
    %v602 = vld [vmem:[#allocation4 + $0x34] sm:$0xf]
    %v603 = vld [vmem:[#allocation4 + $0x38] sm:$0xf]
    %v604 = vld [vmem:[#allocation4 + $0x3c] sm:$0xf]
    %v605 = vld [vmem:[#allocation3] sm:$0xf]
    %v606 = vld [vmem:[#allocation3 + $0x4] sm:$0xf]
    %v607 = vld [vmem:[#allocation3 + $0x8] sm:$0xf]
    %v608 = vld [vmem:[#allocation3 + $0xc] sm:$0xf]
    %v609 = vld [vmem:[#allocation3 + $0x10] sm:$0xf]
    %v610 = vld [vmem:[#allocation3 + $0x14] sm:$0xf]
    %v611 = vld [vmem:[#allocation3 + $0x18] sm:$0xf]
    %v612 = vld [vmem:[#allocation3 + $0x1c] sm:$0xf]
    %v613 = vld [vmem:[#allocation3 + $0x20] sm:$0xf]
    %v614 = vld [vmem:[#allocation3 + $0x24] sm:$0xf]
    %v615 = vld [vmem:[#allocation3 + $0x28] sm:$0xf]
    %v616 = vld [vmem:[#allocation3 + $0x2c] sm:$0xf]
    %v617 = vld [vmem:[#allocation3 + $0x30] sm:$0xf]
    %v618 = vld [vmem:[#allocation3 + $0x34] sm:$0xf]
    %v619 = vld [vmem:[#allocation3 + $0x38] sm:$0xf]
    %v620 = vld [vmem:[#allocation3 + $0x3c] sm:$0xf]
    %v637 = vunpack.c.l.b16 %v589
    %v638 = vunpack.c.l.b16 %v590
    %v639 = vunpack.c.l.b16 %v591
    %v640 = vunpack.c.l.b16 %v592
    %v641 = vunpack.c.l.b16 %v593
    %v642 = vunpack.c.l.b16 %v594
    %v643 = vunpack.c.l.b16 %v595
    %v644 = vunpack.c.l.b16 %v596
    %v645 = vunpack.c.l.b16 %v597
    %v646 = vunpack.c.l.b16 %v598
    %v647 = vunpack.c.l.b16 %v599
    %v648 = vunpack.c.l.b16 %v600
    %v649 = vunpack.c.l.b16 %v601
    %v650 = vunpack.c.l.b16 %v602
    %v651 = vunpack.c.l.b16 %v603
    %v652 = vunpack.c.l.b16 %v604
    %v653 = vpack.c.b16 %v638, %v637
    %v654 = vpack.c.b16 %v640, %v639
    %v655 = vpack.c.b16 %v642, %v641
    %v656 = vpack.c.b16 %v644, %v643
    %v657 = vpack.c.b16 %v646, %v645
    %v658 = vpack.c.b16 %v648, %v647
    %v659 = vpack.c.b16 %v650, %v649
    %v660 = vpack.c.b16 %v652, %v651
    %v685 = vunpack.c.l.b16 %v605
    %v686 = vunpack.c.l.b16 %v606
    %v687 = vunpack.c.l.b16 %v607
    %v688 = vunpack.c.l.b16 %v608
    %v689 = vunpack.c.l.b16 %v609
    %v690 = vunpack.c.l.b16 %v610
    %v691 = vunpack.c.l.b16 %v611
    %v692 = vunpack.c.l.b16 %v612
    %v693 = vunpack.c.l.b16 %v613
    %v694 = vunpack.c.l.b16 %v614
    %v695 = vunpack.c.l.b16 %v615
    %v696 = vunpack.c.l.b16 %v616
    %v697 = vunpack.c.l.b16 %v617
    %v698 = vunpack.c.l.b16 %v618
    %v699 = vunpack.c.l.b16 %v619
    %v700 = vunpack.c.l.b16 %v620
    %v701 = vpack.c.b16 %v686, %v685
    %v702 = vpack.c.b16 %v688, %v687
    %v703 = vpack.c.b16 %v690, %v689
    %v704 = vpack.c.b16 %v692, %v691
    %v705 = vpack.c.b16 %v694, %v693
    %v706 = vpack.c.b16 %v696, %v695
    %v707 = vpack.c.b16 %v698, %v697
    %v708 = vpack.c.b16 %v700, %v699
    %717 = vmatprep.subr.bf16.mxu0 0
    %718 = vmatpush1.bf16.msra.mxu0 %v708
    %719 = vmatprep.subr.bf16.mxu0 0
    %720 = vmatpush1.bf16.msra.mxu0 %v707
    %721 = vmatprep.subr.bf16.mxu0 0
    %722 = vmatpush1.bf16.msra.mxu0 %v706
    %723 = vmatprep.subr.bf16.mxu0 0
    %724 = vmatpush1.bf16.msra.mxu0 %v705
    %725 = vmatprep.subr.bf16.mxu0 0
    %726 = vmatpush1.bf16.msra.mxu0 %v704
    %727 = vmatprep.subr.bf16.mxu0 0
    %728 = vmatpush1.bf16.msra.mxu0 %v703
    %729 = vmatprep.subr.bf16.mxu0 0
    %730 = vmatpush1.bf16.msra.mxu0 %v702
    %731 = vmatprep.subr.bf16.mxu0 0
    %732 = vmatpush1.bf16.msra.mxu0 %v701
    %733 = vmatprep.subr.bf16.mxu0 0
    %734 = vmatpush2.bf16.msra.mxu0 0
    %735 = vmatprep.subr.bf16.mxu0 0
    %736 = vmatpush2.bf16.msra.mxu0 0
    %737 = vmatprep.subr.bf16.mxu0 0
    %738 = vmatpush2.bf16.msra.mxu0 0
    %739 = vmatprep.subr.bf16.mxu0 0
    %740 = vmatpush2.bf16.msra.mxu0 0
    %741 = vmatprep.subr.bf16.mxu0 0
    %742 = vmatpush2.bf16.msra.mxu0 0
    %743 = vmatprep.subr.bf16.mxu0 0
    %744 = vmatpush2.bf16.msra.mxu0 0
    %745 = vmatprep.subr.bf16.mxu0 0
    %746 = vmatpush2.bf16.msra.mxu0 0
    %747 = vmatprep.subr.bf16.mxu0 0
    %748 = vmatpush2.bf16.msra.mxu0 0
    %749 = vmatprep.mubr.bf16.mxu0 0
    %750 = vmatmul.mubr.bf16.gmra.mxu0 %v653
    %v751 = vpop.f32.mrf.mxu0
    %v752 = vadd.f32 0.0, %v751
    %v753 = vpop.f32.mrf.mxu0
    %v754 = vpop.f32.mrf.mxu0
    %v755 = vadd.f32 0.0, %v754
    %v756 = vpop.f32.mrf.mxu0
    %757 = vmatprep.mubr.bf16.mxu0 0
    %758 = vmatmul.mubr.bf16.gmra.mxu0 %v654
    %v759 = vpop.f32.mrf.mxu0
    %v760 = vadd.f32 0.0, %v759
    %v761 = vpop.f32.mrf.mxu0
    %v762 = vpop.f32.mrf.mxu0
    %v763 = vadd.f32 0.0, %v762
    %v764 = vpop.f32.mrf.mxu0
    %765 = vmatprep.mubr.bf16.mxu0 0
    %766 = vmatmul.mubr.bf16.gmra.mxu0 %v655
    %v767 = vpop.f32.mrf.mxu0
    %v768 = vadd.f32 0.0, %v767
    %v769 = vpop.f32.mrf.mxu0
    %v770 = vpop.f32.mrf.mxu0
    %v771 = vadd.f32 0.0, %v770
    %v772 = vpop.f32.mrf.mxu0
    %773 = vmatprep.mubr.bf16.mxu0 0
    %774 = vmatmul.mubr.bf16.gmra.mxu0 %v656
    %v775 = vpop.f32.mrf.mxu0
    %v776 = vadd.f32 0.0, %v775
    %v777 = vpop.f32.mrf.mxu0
    %v778 = vpop.f32.mrf.mxu0
    %v779 = vadd.f32 0.0, %v778
    %v780 = vpop.f32.mrf.mxu0
    %781 = vmatprep.mubr.bf16.mxu0 0
    %782 = vmatmul.mubr.bf16.gmra.mxu0 %v657
    %v783 = vpop.f32.mrf.mxu0
    %v784 = vadd.f32 0.0, %v783
    %v785 = vpop.f32.mrf.mxu0
    %v786 = vpop.f32.mrf.mxu0
    %v787 = vadd.f32 0.0, %v786
    %v788 = vpop.f32.mrf.mxu0
    %789 = vmatprep.mubr.bf16.mxu0 0
    %790 = vmatmul.mubr.bf16.gmra.mxu0 %v658
    %v791 = vpop.f32.mrf.mxu0
    %v792 = vadd.f32 0.0, %v791
    %v793 = vpop.f32.mrf.mxu0
    %v794 = vpop.f32.mrf.mxu0
    %v795 = vadd.f32 0.0, %v794
    %v796 = vpop.f32.mrf.mxu0
    %797 = vmatprep.mubr.bf16.mxu0 0
    %798 = vmatmul.mubr.bf16.gmra.mxu0 %v659
    %v799 = vpop.f32.mrf.mxu0
    %v800 = vadd.f32 0.0, %v799
    %v801 = vpop.f32.mrf.mxu0
    %v802 = vpop.f32.mrf.mxu0
    %v803 = vadd.f32 0.0, %v802
    %v804 = vpop.f32.mrf.mxu0
    %805 = vmatprep.mubr.bf16.mxu0 0
    %806 = vmatmul.mubr.bf16.gmra.mxu0 %v660
    %v807 = vpop.f32.mrf.mxu0
    %v808 = vadd.f32 0.0, %v807
    %v809 = vpop.f32.mrf.mxu0
    %v810 = vpop.f32.mrf.mxu0
    %v811 = vadd.f32 0.0, %v810
    %v812 = vpop.f32.mrf.mxu0
    %813 = vdwg.mxu0
    %v814 = vpack.c.bf16 %v755, %v752
    %v815 = vpack.c.bf16 %v763, %v760
    %v816 = vpack.c.bf16 %v771, %v768
    %v817 = vpack.c.bf16 %v779, %v776
    %v818 = vpack.c.bf16 %v787, %v784
    %v819 = vpack.c.bf16 %v795, %v792
    %v820 = vpack.c.bf16 %v803, %v800
    %v821 = vpack.c.bf16 %v811, %v808
    %s822 = scalar_lea.vmem [#allocation9], 64
    %v823 = vld [vmem:[%s822] sm:$0xf]
    %v824 = vld [vmem:[%s822 + $0x4] sm:$0xf]
    %v825 = vld [vmem:[%s822 + $0x8] sm:$0xf]
    %v826 = vld [vmem:[%s822 + $0xc] sm:$0xf]
    %v827 = vld [vmem:[%s822 + $0x10] sm:$0xf]
    %v828 = vld [vmem:[%s822 + $0x14] sm:$0xf]
    %v829 = vld [vmem:[%s822 + $0x18] sm:$0xf]
    %v830 = vld [vmem:[%s822 + $0x1c] sm:$0xf]
    %v831 = vld [vmem:[%s822 + $0x20] sm:$0xf]
    %v832 = vld [vmem:[%s822 + $0x24] sm:$0xf]
    %v833 = vld [vmem:[%s822 + $0x28] sm:$0xf]
    %v834 = vld [vmem:[%s822 + $0x2c] sm:$0xf]
    %v835 = vld [vmem:[%s822 + $0x30] sm:$0xf]
    %v836 = vld [vmem:[%s822 + $0x34] sm:$0xf]
    %v837 = vld [vmem:[%s822 + $0x38] sm:$0xf]
    %v838 = vld [vmem:[%s822 + $0x3c] sm:$0xf]
    %s839 = scalar_lea.vmem %s3, 1
    %v840 = vld [vmem:[%s839] sm:$0x1]
    %v842 = vlaneseq
    %v843 = vshrl.u32 %v842, 7
    %v844 = vsub.s32 0, %v843
    %v845 = vrot.slane %v840, %v844
    %v863 = vunpack.c.l.b16 %v823
    %v864 = vunpack.c.l.b16 %v824
    %v865 = vunpack.c.l.b16 %v825
    %v866 = vunpack.c.l.b16 %v826
    %v867 = vunpack.c.l.b16 %v827
    %v868 = vunpack.c.l.b16 %v828
    %v869 = vunpack.c.l.b16 %v829
    %v870 = vunpack.c.l.b16 %v830
    %v871 = vunpack.c.l.b16 %v831
    %v872 = vunpack.c.l.b16 %v832
    %v873 = vunpack.c.l.b16 %v833
    %v874 = vunpack.c.l.b16 %v834
    %v875 = vunpack.c.l.b16 %v835
    %v876 = vunpack.c.l.b16 %v836
    %v877 = vunpack.c.l.b16 %v837
    %v878 = vunpack.c.l.b16 %v838
    %v879 = vpack.c.b16 %v864, %v863
    %v880 = vpack.c.b16 %v866, %v865
    %v881 = vpack.c.b16 %v868, %v867
    %v882 = vpack.c.b16 %v870, %v869
    %v883 = vpack.c.b16 %v872, %v871
    %v884 = vpack.c.b16 %v874, %v873
    %v885 = vpack.c.b16 %v876, %v875
    %v886 = vpack.c.b16 %v878, %v877
    %895 = vmatprep.subr.bf16.mxu0 0
    %896 = vmatpush1.bf16.msra.mxu0 %v886
    %897 = vmatprep.subr.bf16.mxu0 0
    %898 = vmatpush1.bf16.msra.mxu0 %v885
    %899 = vmatprep.subr.bf16.mxu0 0
    %900 = vmatpush1.bf16.msra.mxu0 %v884
    %901 = vmatprep.subr.bf16.mxu0 0
    %902 = vmatpush1.bf16.msra.mxu0 %v883
    %903 = vmatprep.subr.bf16.mxu0 0
    %904 = vmatpush1.bf16.msra.mxu0 %v882
    %905 = vmatprep.subr.bf16.mxu0 0
    %906 = vmatpush1.bf16.msra.mxu0 %v881
    %907 = vmatprep.subr.bf16.mxu0 0
    %908 = vmatpush1.bf16.msra.mxu0 %v880
    %909 = vmatprep.subr.bf16.mxu0 0
    %910 = vmatpush1.bf16.msra.mxu0 %v879
    %911 = vmatprep.subr.bf16.mxu0 0
    %912 = vmatpush2.bf16.msra.mxu0 0
    %913 = vmatprep.subr.bf16.mxu0 0
    %914 = vmatpush2.bf16.msra.mxu0 0
    %915 = vmatprep.subr.bf16.mxu0 0
    %916 = vmatpush2.bf16.msra.mxu0 0
    %917 = vmatprep.subr.bf16.mxu0 0
    %918 = vmatpush2.bf16.msra.mxu0 0
    %919 = vmatprep.subr.bf16.mxu0 0
    %920 = vmatpush2.bf16.msra.mxu0 0
    %921 = vmatprep.subr.bf16.mxu0 0
    %922 = vmatpush2.bf16.msra.mxu0 0
    %923 = vmatprep.subr.bf16.mxu0 0
    %924 = vmatpush2.bf16.msra.mxu0 0
    %925 = vmatprep.subr.bf16.mxu0 0
    %926 = vmatpush2.bf16.msra.mxu0 0
    %927 = vmatprep.mubr.bf16.mxu0 0
    %928 = vmatmul.mubr.bf16.gmra.mxu0 %v814
    %v929 = vpop.f32.mrf.mxu0
    %v930 = vadd.f32 %v845, %v929
    %v931 = vpop.f32.mrf.mxu0
    %v932 = vpop.f32.mrf.mxu0
    %v933 = vadd.f32 %v845, %v932
    %v934 = vpop.f32.mrf.mxu0
    %935 = vmatprep.mubr.bf16.mxu0 0
    %936 = vmatmul.mubr.bf16.gmra.mxu0 %v815
    %v937 = vpop.f32.mrf.mxu0
    %v938 = vadd.f32 %v845, %v937
    %v939 = vpop.f32.mrf.mxu0
    %v940 = vpop.f32.mrf.mxu0
    %v941 = vadd.f32 %v845, %v940
    %v942 = vpop.f32.mrf.mxu0
    %943 = vmatprep.mubr.bf16.mxu0 0
    %944 = vmatmul.mubr.bf16.gmra.mxu0 %v816
    %v945 = vpop.f32.mrf.mxu0
    %v946 = vadd.f32 %v845, %v945
    %v947 = vpop.f32.mrf.mxu0
    %v948 = vpop.f32.mrf.mxu0
    %v949 = vadd.f32 %v845, %v948
    %v950 = vpop.f32.mrf.mxu0
    %951 = vmatprep.mubr.bf16.mxu0 0
    %952 = vmatmul.mubr.bf16.gmra.mxu0 %v817
    %v953 = vpop.f32.mrf.mxu0
    %v954 = vadd.f32 %v845, %v953
    %v955 = vpop.f32.mrf.mxu0
    %v956 = vpop.f32.mrf.mxu0
    %v957 = vadd.f32 %v845, %v956
    %v958 = vpop.f32.mrf.mxu0
    %959 = vmatprep.mubr.bf16.mxu0 0
    %960 = vmatmul.mubr.bf16.gmra.mxu0 %v818
    %v961 = vpop.f32.mrf.mxu0
    %v962 = vadd.f32 %v845, %v961
    %v963 = vpop.f32.mrf.mxu0
    %v964 = vpop.f32.mrf.mxu0
    %v965 = vadd.f32 %v845, %v964
    %v966 = vpop.f32.mrf.mxu0
    %967 = vmatprep.mubr.bf16.mxu0 0
    %968 = vmatmul.mubr.bf16.gmra.mxu0 %v819
    %v969 = vpop.f32.mrf.mxu0
    %v970 = vadd.f32 %v845, %v969
    %v971 = vpop.f32.mrf.mxu0
    %v972 = vpop.f32.mrf.mxu0
    %v973 = vadd.f32 %v845, %v972
    %v974 = vpop.f32.mrf.mxu0
    %975 = vmatprep.mubr.bf16.mxu0 0
    %976 = vmatmul.mubr.bf16.gmra.mxu0 %v820
    %v977 = vpop.f32.mrf.mxu0
    %v978 = vadd.f32 %v845, %v977
    %v979 = vpop.f32.mrf.mxu0
    %v980 = vpop.f32.mrf.mxu0
    %v981 = vadd.f32 %v845, %v980
    %v982 = vpop.f32.mrf.mxu0
    %983 = vmatprep.mubr.bf16.mxu0 0
    %984 = vmatmul.mubr.bf16.gmra.mxu0 %v821
    %v985 = vpop.f32.mrf.mxu0
    %v986 = vadd.f32 %v845, %v985
    %v987 = vpop.f32.mrf.mxu0
    %v988 = vpop.f32.mrf.mxu0
    %v989 = vadd.f32 %v845, %v988
    %v990 = vpop.f32.mrf.mxu0
    %991 = vdwg.mxu0
    %v992 = vmax.f32 %v930, 0.0
    %v993 = vmax.f32 %v933, 0.0
    %v994 = vmax.f32 %v938, 0.0
    %v995 = vmax.f32 %v941, 0.0
    %v996 = vmax.f32 %v946, 0.0
    %v997 = vmax.f32 %v949, 0.0
    %v998 = vmax.f32 %v954, 0.0
    %v999 = vmax.f32 %v957, 0.0
    %v1000 = vmax.f32 %v962, 0.0
    %v1001 = vmax.f32 %v965, 0.0
    %v1002 = vmax.f32 %v970, 0.0
    %v1003 = vmax.f32 %v973, 0.0
    %v1004 = vmax.f32 %v978, 0.0
    %v1005 = vmax.f32 %v981, 0.0
    %v1006 = vmax.f32 %v986, 0.0
    %v1007 = vmax.f32 %v989, 0.0
    %v1008 = vpack.c.bf16 %v993, %v992
    %v1009 = vpack.c.bf16 %v995, %v994
    %v1010 = vpack.c.bf16 %v997, %v996
    %v1011 = vpack.c.bf16 %v999, %v998
    %v1012 = vpack.c.bf16 %v1001, %v1000
    %v1013 = vpack.c.bf16 %v1003, %v1002
    %v1014 = vpack.c.bf16 %v1005, %v1004
    %v1015 = vpack.c.bf16 %v1007, %v1006
    %v1024 = vunpack.c.l.b16 %v1008
    %v1025 = vunpack.c.h.b16 %v1008
    %v1026 = vunpack.c.l.b16 %v1009
    %v1027 = vunpack.c.h.b16 %v1009
    %v1028 = vunpack.c.l.b16 %v1010
    %v1029 = vunpack.c.h.b16 %v1010
    %v1030 = vunpack.c.l.b16 %v1011
    %v1031 = vunpack.c.h.b16 %v1011
    %v1032 = vunpack.c.l.b16 %v1012
    %v1033 = vunpack.c.h.b16 %v1012
    %v1034 = vunpack.c.l.b16 %v1013
    %v1035 = vunpack.c.h.b16 %v1013
    %v1036 = vunpack.c.l.b16 %v1014
    %v1037 = vunpack.c.h.b16 %v1014
    %v1038 = vunpack.c.l.b16 %v1015
    %v1039 = vunpack.c.h.b16 %v1015
    %v1040 = vpack.c.b16 %v1024, %v1024
    %v1041 = vpack.c.b16 %v1025, %v1025
    %v1042 = vpack.c.b16 %v1026, %v1026
    %v1043 = vpack.c.b16 %v1027, %v1027
    %v1044 = vpack.c.b16 %v1028, %v1028
    %v1045 = vpack.c.b16 %v1029, %v1029
    %v1046 = vpack.c.b16 %v1030, %v1030
    %v1047 = vpack.c.b16 %v1031, %v1031
    %v1048 = vpack.c.b16 %v1032, %v1032
    %v1049 = vpack.c.b16 %v1033, %v1033
    %v1050 = vpack.c.b16 %v1034, %v1034
    %v1051 = vpack.c.b16 %v1035, %v1035
    %v1052 = vpack.c.b16 %v1036, %v1036
    %v1053 = vpack.c.b16 %v1037, %v1037
    %v1054 = vpack.c.b16 %v1038, %v1038
    %v1055 = vpack.c.b16 %v1039, %v1039
    %1072 = vst [vmem:[#allocation2] sm:$0xf] %v1040
    %1073 = vst [vmem:[#allocation2 + $0x4] sm:$0xf] %v1041
    %1074 = vst [vmem:[#allocation2 + $0x8] sm:$0xf] %v1042
    %1075 = vst [vmem:[#allocation2 + $0xc] sm:$0xf] %v1043
    %1076 = vst [vmem:[#allocation2 + $0x10] sm:$0xf] %v1044
    %1077 = vst [vmem:[#allocation2 + $0x14] sm:$0xf] %v1045
    %1078 = vst [vmem:[#allocation2 + $0x18] sm:$0xf] %v1046
    %1079 = vst [vmem:[#allocation2 + $0x1c] sm:$0xf] %v1047
    %1080 = vst [vmem:[#allocation2 + $0x20] sm:$0xf] %v1048
    %1081 = vst [vmem:[#allocation2 + $0x24] sm:$0xf] %v1049
    %1082 = vst [vmem:[#allocation2 + $0x28] sm:$0xf] %v1050
    %1083 = vst [vmem:[#allocation2 + $0x2c] sm:$0xf] %v1051
    %1084 = vst [vmem:[#allocation2 + $0x30] sm:$0xf] %v1052
    %1085 = vst [vmem:[#allocation2 + $0x34] sm:$0xf] %v1053
    %1086 = vst [vmem:[#allocation2 + $0x38] sm:$0xf] %v1054
    %1087 = vst [vmem:[#allocation2 + $0x3c] sm:$0xf] %v1055
    %v1088 = vld [vmem:[#allocation4] sm:$0xf]
    %v1089 = vld [vmem:[#allocation4 + $0x4] sm:$0xf]
    %v1090 = vld [vmem:[#allocation4 + $0x8] sm:$0xf]
    %v1091 = vld [vmem:[#allocation4 + $0xc] sm:$0xf]
    %v1092 = vld [vmem:[#allocation4 + $0x10] sm:$0xf]
    %v1093 = vld [vmem:[#allocation4 + $0x14] sm:$0xf]
    %v1094 = vld [vmem:[#allocation4 + $0x18] sm:$0xf]
    %v1095 = vld [vmem:[#allocation4 + $0x1c] sm:$0xf]
    %v1096 = vld [vmem:[#allocation4 + $0x20] sm:$0xf]
    %v1097 = vld [vmem:[#allocation4 + $0x24] sm:$0xf]
    %v1098 = vld [vmem:[#allocation4 + $0x28] sm:$0xf]
    %v1099 = vld [vmem:[#allocation4 + $0x2c] sm:$0xf]
    %v1100 = vld [vmem:[#allocation4 + $0x30] sm:$0xf]
    %v1101 = vld [vmem:[#allocation4 + $0x34] sm:$0xf]
    %v1102 = vld [vmem:[#allocation4 + $0x38] sm:$0xf]
    %v1103 = vld [vmem:[#allocation4 + $0x3c] sm:$0xf]
    %v1104 = vld [vmem:[#allocation2] sm:$0xf]
    %v1105 = vld [vmem:[#allocation2 + $0x4] sm:$0xf]
    %v1106 = vld [vmem:[#allocation2 + $0x8] sm:$0xf]
    %v1107 = vld [vmem:[#allocation2 + $0xc] sm:$0xf]
    %v1108 = vld [vmem:[#allocation2 + $0x10] sm:$0xf]
    %v1109 = vld [vmem:[#allocation2 + $0x14] sm:$0xf]
    %v1110 = vld [vmem:[#allocation2 + $0x18] sm:$0xf]
    %v1111 = vld [vmem:[#allocation2 + $0x1c] sm:$0xf]
    %v1112 = vld [vmem:[#allocation2 + $0x20] sm:$0xf]
    %v1113 = vld [vmem:[#allocation2 + $0x24] sm:$0xf]
    %v1114 = vld [vmem:[#allocation2 + $0x28] sm:$0xf]
    %v1115 = vld [vmem:[#allocation2 + $0x2c] sm:$0xf]
    %v1116 = vld [vmem:[#allocation2 + $0x30] sm:$0xf]
    %v1117 = vld [vmem:[#allocation2 + $0x34] sm:$0xf]
    %v1118 = vld [vmem:[#allocation2 + $0x38] sm:$0xf]
    %v1119 = vld [vmem:[#allocation2 + $0x3c] sm:$0xf]
    %v1136 = vunpack.c.l.b16 %v1088
    %v1137 = vunpack.c.l.b16 %v1089
    %v1138 = vunpack.c.l.b16 %v1090
    %v1139 = vunpack.c.l.b16 %v1091
    %v1140 = vunpack.c.l.b16 %v1092
    %v1141 = vunpack.c.l.b16 %v1093
    %v1142 = vunpack.c.l.b16 %v1094
    %v1143 = vunpack.c.l.b16 %v1095
    %v1144 = vunpack.c.l.b16 %v1096
    %v1145 = vunpack.c.l.b16 %v1097
    %v1146 = vunpack.c.l.b16 %v1098
    %v1147 = vunpack.c.l.b16 %v1099
    %v1148 = vunpack.c.l.b16 %v1100
    %v1149 = vunpack.c.l.b16 %v1101
    %v1150 = vunpack.c.l.b16 %v1102
    %v1151 = vunpack.c.l.b16 %v1103
    %v1152 = vpack.c.b16 %v1137, %v1136
    %v1153 = vpack.c.b16 %v1139, %v1138
    %v1154 = vpack.c.b16 %v1141, %v1140
    %v1155 = vpack.c.b16 %v1143, %v1142
    %v1156 = vpack.c.b16 %v1145, %v1144
    %v1157 = vpack.c.b16 %v1147, %v1146
    %v1158 = vpack.c.b16 %v1149, %v1148
    %v1159 = vpack.c.b16 %v1151, %v1150
    %v1184 = vunpack.c.l.b16 %v1104
    %v1185 = vunpack.c.l.b16 %v1105
    %v1186 = vunpack.c.l.b16 %v1106
    %v1187 = vunpack.c.l.b16 %v1107
    %v1188 = vunpack.c.l.b16 %v1108
    %v1189 = vunpack.c.l.b16 %v1109
    %v1190 = vunpack.c.l.b16 %v1110
    %v1191 = vunpack.c.l.b16 %v1111
    %v1192 = vunpack.c.l.b16 %v1112
    %v1193 = vunpack.c.l.b16 %v1113
    %v1194 = vunpack.c.l.b16 %v1114
    %v1195 = vunpack.c.l.b16 %v1115
    %v1196 = vunpack.c.l.b16 %v1116
    %v1197 = vunpack.c.l.b16 %v1117
    %v1198 = vunpack.c.l.b16 %v1118
    %v1199 = vunpack.c.l.b16 %v1119
    %v1200 = vpack.c.b16 %v1185, %v1184
    %v1201 = vpack.c.b16 %v1187, %v1186
    %v1202 = vpack.c.b16 %v1189, %v1188
    %v1203 = vpack.c.b16 %v1191, %v1190
    %v1204 = vpack.c.b16 %v1193, %v1192
    %v1205 = vpack.c.b16 %v1195, %v1194
    %v1206 = vpack.c.b16 %v1197, %v1196
    %v1207 = vpack.c.b16 %v1199, %v1198
    %1216 = vmatprep.subr.bf16.mxu0 0
    %1217 = vmatpush1.bf16.msra.mxu0 %v1207
    %1218 = vmatprep.subr.bf16.mxu0 0
    %1219 = vmatpush1.bf16.msra.mxu0 %v1206
    %1220 = vmatprep.subr.bf16.mxu0 0
    %1221 = vmatpush1.bf16.msra.mxu0 %v1205
    %1222 = vmatprep.subr.bf16.mxu0 0
    %1223 = vmatpush1.bf16.msra.mxu0 %v1204
    %1224 = vmatprep.subr.bf16.mxu0 0
    %1225 = vmatpush1.bf16.msra.mxu0 %v1203
    %1226 = vmatprep.subr.bf16.mxu0 0
    %1227 = vmatpush1.bf16.msra.mxu0 %v1202
    %1228 = vmatprep.subr.bf16.mxu0 0
    %1229 = vmatpush1.bf16.msra.mxu0 %v1201
    %1230 = vmatprep.subr.bf16.mxu0 0
    %1231 = vmatpush1.bf16.msra.mxu0 %v1200
    %1232 = vmatprep.subr.bf16.mxu0 0
    %1233 = vmatpush2.bf16.msra.mxu0 0
    %1234 = vmatprep.subr.bf16.mxu0 0
    %1235 = vmatpush2.bf16.msra.mxu0 0
    %1236 = vmatprep.subr.bf16.mxu0 0
    %1237 = vmatpush2.bf16.msra.mxu0 0
    %1238 = vmatprep.subr.bf16.mxu0 0
    %1239 = vmatpush2.bf16.msra.mxu0 0
    %1240 = vmatprep.subr.bf16.mxu0 0
    %1241 = vmatpush2.bf16.msra.mxu0 0
    %1242 = vmatprep.subr.bf16.mxu0 0
    %1243 = vmatpush2.bf16.msra.mxu0 0
    %1244 = vmatprep.subr.bf16.mxu0 0
    %1245 = vmatpush2.bf16.msra.mxu0 0
    %1246 = vmatprep.subr.bf16.mxu0 0
    %1247 = vmatpush2.bf16.msra.mxu0 0
    %1248 = vmatprep.mubr.bf16.mxu0 0
    %1249 = vmatmul.mubr.bf16.gmra.mxu0 %v1152
    %v1250 = vpop.f32.mrf.mxu0
    %v1251 = vadd.f32 0.0, %v1250
    %v1252 = vpop.f32.mrf.mxu0
    %v1253 = vpop.f32.mrf.mxu0
    %v1254 = vadd.f32 0.0, %v1253
    %v1255 = vpop.f32.mrf.mxu0
    %1256 = vmatprep.mubr.bf16.mxu0 0
    %1257 = vmatmul.mubr.bf16.gmra.mxu0 %v1153
    %v1258 = vpop.f32.mrf.mxu0
    %v1259 = vadd.f32 0.0, %v1258
    %v1260 = vpop.f32.mrf.mxu0
    %v1261 = vpop.f32.mrf.mxu0
    %v1262 = vadd.f32 0.0, %v1261
    %v1263 = vpop.f32.mrf.mxu0
    %1264 = vmatprep.mubr.bf16.mxu0 0
    %1265 = vmatmul.mubr.bf16.gmra.mxu0 %v1154
    %v1266 = vpop.f32.mrf.mxu0
    %v1267 = vadd.f32 0.0, %v1266
    %v1268 = vpop.f32.mrf.mxu0
    %v1269 = vpop.f32.mrf.mxu0
    %v1270 = vadd.f32 0.0, %v1269
    %v1271 = vpop.f32.mrf.mxu0
    %1272 = vmatprep.mubr.bf16.mxu0 0
    %1273 = vmatmul.mubr.bf16.gmra.mxu0 %v1155
    %v1274 = vpop.f32.mrf.mxu0
    %v1275 = vadd.f32 0.0, %v1274
    %v1276 = vpop.f32.mrf.mxu0
    %v1277 = vpop.f32.mrf.mxu0
    %v1278 = vadd.f32 0.0, %v1277
    %v1279 = vpop.f32.mrf.mxu0
    %1280 = vmatprep.mubr.bf16.mxu0 0
    %1281 = vmatmul.mubr.bf16.gmra.mxu0 %v1156
    %v1282 = vpop.f32.mrf.mxu0
    %v1283 = vadd.f32 0.0, %v1282
    %v1284 = vpop.f32.mrf.mxu0
    %v1285 = vpop.f32.mrf.mxu0
    %v1286 = vadd.f32 0.0, %v1285
    %v1287 = vpop.f32.mrf.mxu0
    %1288 = vmatprep.mubr.bf16.mxu0 0
    %1289 = vmatmul.mubr.bf16.gmra.mxu0 %v1157
    %v1290 = vpop.f32.mrf.mxu0
    %v1291 = vadd.f32 0.0, %v1290
    %v1292 = vpop.f32.mrf.mxu0
    %v1293 = vpop.f32.mrf.mxu0
    %v1294 = vadd.f32 0.0, %v1293
    %v1295 = vpop.f32.mrf.mxu0
    %1296 = vmatprep.mubr.bf16.mxu0 0
    %1297 = vmatmul.mubr.bf16.gmra.mxu0 %v1158
    %v1298 = vpop.f32.mrf.mxu0
    %v1299 = vadd.f32 0.0, %v1298
    %v1300 = vpop.f32.mrf.mxu0
    %v1301 = vpop.f32.mrf.mxu0
    %v1302 = vadd.f32 0.0, %v1301
    %v1303 = vpop.f32.mrf.mxu0
    %1304 = vmatprep.mubr.bf16.mxu0 0
    %1305 = vmatmul.mubr.bf16.gmra.mxu0 %v1159
    %v1306 = vpop.f32.mrf.mxu0
    %v1307 = vadd.f32 0.0, %v1306
    %v1308 = vpop.f32.mrf.mxu0
    %v1309 = vpop.f32.mrf.mxu0
    %v1310 = vadd.f32 0.0, %v1309
    %v1311 = vpop.f32.mrf.mxu0
    %1312 = vdwg.mxu0
    %v1313 = vpack.c.bf16 %v1254, %v1251
    %v1314 = vpack.c.bf16 %v1262, %v1259
    %v1315 = vpack.c.bf16 %v1270, %v1267
    %v1316 = vpack.c.bf16 %v1278, %v1275
    %v1317 = vpack.c.bf16 %v1286, %v1283
    %v1318 = vpack.c.bf16 %v1294, %v1291
    %v1319 = vpack.c.bf16 %v1302, %v1299
    %v1320 = vpack.c.bf16 %v1310, %v1307
    %s1321 = scalar_lea.vmem [#allocation9], 128
    %v1322 = vld [vmem:[%s1321] sm:$0xf]
    %v1323 = vld [vmem:[%s1321 + $0x4] sm:$0xf]
    %v1324 = vld [vmem:[%s1321 + $0x8] sm:$0xf]
    %v1325 = vld [vmem:[%s1321 + $0xc] sm:$0xf]
    %v1326 = vld [vmem:[%s1321 + $0x10] sm:$0xf]
    %v1327 = vld [vmem:[%s1321 + $0x14] sm:$0xf]
    %v1328 = vld [vmem:[%s1321 + $0x18] sm:$0xf]
    %v1329 = vld [vmem:[%s1321 + $0x1c] sm:$0xf]
    %v1330 = vld [vmem:[%s1321 + $0x20] sm:$0xf]
    %v1331 = vld [vmem:[%s1321 + $0x24] sm:$0xf]
    %v1332 = vld [vmem:[%s1321 + $0x28] sm:$0xf]
    %v1333 = vld [vmem:[%s1321 + $0x2c] sm:$0xf]
    %v1334 = vld [vmem:[%s1321 + $0x30] sm:$0xf]
    %v1335 = vld [vmem:[%s1321 + $0x34] sm:$0xf]
    %v1336 = vld [vmem:[%s1321 + $0x38] sm:$0xf]
    %v1337 = vld [vmem:[%s1321 + $0x3c] sm:$0xf]
    %s1338 = scalar_lea.vmem %s3, 2
    %v1339 = vld [vmem:[%s1338] sm:$0x1]
    %v1341 = vlaneseq
    %v1342 = vshrl.u32 %v1341, 7
    %v1343 = vsub.s32 0, %v1342
    %v1344 = vrot.slane %v1339, %v1343
    %v1362 = vunpack.c.l.b16 %v1322
    %v1363 = vunpack.c.l.b16 %v1323
    %v1364 = vunpack.c.l.b16 %v1324
    %v1365 = vunpack.c.l.b16 %v1325
    %v1366 = vunpack.c.l.b16 %v1326
    %v1367 = vunpack.c.l.b16 %v1327
    %v1368 = vunpack.c.l.b16 %v1328
    %v1369 = vunpack.c.l.b16 %v1329
    %v1370 = vunpack.c.l.b16 %v1330
    %v1371 = vunpack.c.l.b16 %v1331
    %v1372 = vunpack.c.l.b16 %v1332
    %v1373 = vunpack.c.l.b16 %v1333
    %v1374 = vunpack.c.l.b16 %v1334
    %v1375 = vunpack.c.l.b16 %v1335
    %v1376 = vunpack.c.l.b16 %v1336
    %v1377 = vunpack.c.l.b16 %v1337
    %v1378 = vpack.c.b16 %v1363, %v1362
    %v1379 = vpack.c.b16 %v1365, %v1364
    %v1380 = vpack.c.b16 %v1367, %v1366
    %v1381 = vpack.c.b16 %v1369, %v1368
    %v1382 = vpack.c.b16 %v1371, %v1370
    %v1383 = vpack.c.b16 %v1373, %v1372
    %v1384 = vpack.c.b16 %v1375, %v1374
    %v1385 = vpack.c.b16 %v1377, %v1376
    %1394 = vmatprep.subr.bf16.mxu0 0
    %1395 = vmatpush1.bf16.msra.mxu0 %v1385
    %1396 = vmatprep.subr.bf16.mxu0 0
    %1397 = vmatpush1.bf16.msra.mxu0 %v1384
    %1398 = vmatprep.subr.bf16.mxu0 0
    %1399 = vmatpush1.bf16.msra.mxu0 %v1383
    %1400 = vmatprep.subr.bf16.mxu0 0
    %1401 = vmatpush1.bf16.msra.mxu0 %v1382
    %1402 = vmatprep.subr.bf16.mxu0 0
    %1403 = vmatpush1.bf16.msra.mxu0 %v1381
    %1404 = vmatprep.subr.bf16.mxu0 0
    %1405 = vmatpush1.bf16.msra.mxu0 %v1380
    %1406 = vmatprep.subr.bf16.mxu0 0
    %1407 = vmatpush1.bf16.msra.mxu0 %v1379
    %1408 = vmatprep.subr.bf16.mxu0 0
    %1409 = vmatpush1.bf16.msra.mxu0 %v1378
    %1410 = vmatprep.subr.bf16.mxu0 0
    %1411 = vmatpush2.bf16.msra.mxu0 0
    %1412 = vmatprep.subr.bf16.mxu0 0
    %1413 = vmatpush2.bf16.msra.mxu0 0
    %1414 = vmatprep.subr.bf16.mxu0 0
    %1415 = vmatpush2.bf16.msra.mxu0 0
    %1416 = vmatprep.subr.bf16.mxu0 0
    %1417 = vmatpush2.bf16.msra.mxu0 0
    %1418 = vmatprep.subr.bf16.mxu0 0
    %1419 = vmatpush2.bf16.msra.mxu0 0
    %1420 = vmatprep.subr.bf16.mxu0 0
    %1421 = vmatpush2.bf16.msra.mxu0 0
    %1422 = vmatprep.subr.bf16.mxu0 0
    %1423 = vmatpush2.bf16.msra.mxu0 0
    %1424 = vmatprep.subr.bf16.mxu0 0
    %1425 = vmatpush2.bf16.msra.mxu0 0
    %1426 = vmatprep.mubr.bf16.mxu0 0
    %1427 = vmatmul.mubr.bf16.gmra.mxu0 %v1313
    %v1428 = vpop.f32.mrf.mxu0
    %v1429 = vadd.f32 %v1344, %v1428
    %v1430 = vpop.f32.mrf.mxu0
    %v1431 = vpop.f32.mrf.mxu0
    %v1432 = vadd.f32 %v1344, %v1431
    %v1433 = vpop.f32.mrf.mxu0
    %1434 = vmatprep.mubr.bf16.mxu0 0
    %1435 = vmatmul.mubr.bf16.gmra.mxu0 %v1314
    %v1436 = vpop.f32.mrf.mxu0
    %v1437 = vadd.f32 %v1344, %v1436
    %v1438 = vpop.f32.mrf.mxu0
    %v1439 = vpop.f32.mrf.mxu0
    %v1440 = vadd.f32 %v1344, %v1439
    %v1441 = vpop.f32.mrf.mxu0
    %1442 = vmatprep.mubr.bf16.mxu0 0
    %1443 = vmatmul.mubr.bf16.gmra.mxu0 %v1315
    %v1444 = vpop.f32.mrf.mxu0
    %v1445 = vadd.f32 %v1344, %v1444
    %v1446 = vpop.f32.mrf.mxu0
    %v1447 = vpop.f32.mrf.mxu0
    %v1448 = vadd.f32 %v1344, %v1447
    %v1449 = vpop.f32.mrf.mxu0
    %1450 = vmatprep.mubr.bf16.mxu0 0
    %1451 = vmatmul.mubr.bf16.gmra.mxu0 %v1316
    %v1452 = vpop.f32.mrf.mxu0
    %v1453 = vadd.f32 %v1344, %v1452
    %v1454 = vpop.f32.mrf.mxu0
    %v1455 = vpop.f32.mrf.mxu0
    %v1456 = vadd.f32 %v1344, %v1455
    %v1457 = vpop.f32.mrf.mxu0
    %1458 = vmatprep.mubr.bf16.mxu0 0
    %1459 = vmatmul.mubr.bf16.gmra.mxu0 %v1317
    %v1460 = vpop.f32.mrf.mxu0
    %v1461 = vadd.f32 %v1344, %v1460
    %v1462 = vpop.f32.mrf.mxu0
    %v1463 = vpop.f32.mrf.mxu0
    %v1464 = vadd.f32 %v1344, %v1463
    %v1465 = vpop.f32.mrf.mxu0
    %1466 = vmatprep.mubr.bf16.mxu0 0
    %1467 = vmatmul.mubr.bf16.gmra.mxu0 %v1318
    %v1468 = vpop.f32.mrf.mxu0
    %v1469 = vadd.f32 %v1344, %v1468
    %v1470 = vpop.f32.mrf.mxu0
    %v1471 = vpop.f32.mrf.mxu0
    %v1472 = vadd.f32 %v1344, %v1471
    %v1473 = vpop.f32.mrf.mxu0
    %1474 = vmatprep.mubr.bf16.mxu0 0
    %1475 = vmatmul.mubr.bf16.gmra.mxu0 %v1319
    %v1476 = vpop.f32.mrf.mxu0
    %v1477 = vadd.f32 %v1344, %v1476
    %v1478 = vpop.f32.mrf.mxu0
    %v1479 = vpop.f32.mrf.mxu0
    %v1480 = vadd.f32 %v1344, %v1479
    %v1481 = vpop.f32.mrf.mxu0
    %1482 = vmatprep.mubr.bf16.mxu0 0
    %1483 = vmatmul.mubr.bf16.gmra.mxu0 %v1320
    %v1484 = vpop.f32.mrf.mxu0
    %v1485 = vadd.f32 %v1344, %v1484
    %v1486 = vpop.f32.mrf.mxu0
    %v1487 = vpop.f32.mrf.mxu0
    %v1488 = vadd.f32 %v1344, %v1487
    %v1489 = vpop.f32.mrf.mxu0
    %1490 = vdwg.mxu0
    %v1491 = vmax.f32 %v1429, 0.0
    %v1492 = vmax.f32 %v1432, 0.0
    %v1493 = vmax.f32 %v1437, 0.0
    %v1494 = vmax.f32 %v1440, 0.0
    %v1495 = vmax.f32 %v1445, 0.0
    %v1496 = vmax.f32 %v1448, 0.0
    %v1497 = vmax.f32 %v1453, 0.0
    %v1498 = vmax.f32 %v1456, 0.0
    %v1499 = vmax.f32 %v1461, 0.0
    %v1500 = vmax.f32 %v1464, 0.0
    %v1501 = vmax.f32 %v1469, 0.0
    %v1502 = vmax.f32 %v1472, 0.0
    %v1503 = vmax.f32 %v1477, 0.0
    %v1504 = vmax.f32 %v1480, 0.0
    %v1505 = vmax.f32 %v1485, 0.0
    %v1506 = vmax.f32 %v1488, 0.0
    %v1507 = vpack.c.bf16 %v1492, %v1491
    %v1508 = vpack.c.bf16 %v1494, %v1493
    %v1509 = vpack.c.bf16 %v1496, %v1495
    %v1510 = vpack.c.bf16 %v1498, %v1497
    %v1511 = vpack.c.bf16 %v1500, %v1499
    %v1512 = vpack.c.bf16 %v1502, %v1501
    %v1513 = vpack.c.bf16 %v1504, %v1503
    %v1514 = vpack.c.bf16 %v1506, %v1505
    %v1523 = vunpack.c.l.b16 %v1507
    %v1524 = vunpack.c.h.b16 %v1507
    %v1525 = vunpack.c.l.b16 %v1508
    %v1526 = vunpack.c.h.b16 %v1508
    %v1527 = vunpack.c.l.b16 %v1509
    %v1528 = vunpack.c.h.b16 %v1509
    %v1529 = vunpack.c.l.b16 %v1510
    %v1530 = vunpack.c.h.b16 %v1510
    %v1531 = vunpack.c.l.b16 %v1511
    %v1532 = vunpack.c.h.b16 %v1511
    %v1533 = vunpack.c.l.b16 %v1512
    %v1534 = vunpack.c.h.b16 %v1512
    %v1535 = vunpack.c.l.b16 %v1513
    %v1536 = vunpack.c.h.b16 %v1513
    %v1537 = vunpack.c.l.b16 %v1514
    %v1538 = vunpack.c.h.b16 %v1514
    %v1539 = vpack.c.b16 %v1523, %v1523
    %v1540 = vpack.c.b16 %v1524, %v1524
    %v1541 = vpack.c.b16 %v1525, %v1525
    %v1542 = vpack.c.b16 %v1526, %v1526
    %v1543 = vpack.c.b16 %v1527, %v1527
    %v1544 = vpack.c.b16 %v1528, %v1528
    %v1545 = vpack.c.b16 %v1529, %v1529
    %v1546 = vpack.c.b16 %v1530, %v1530
    %v1547 = vpack.c.b16 %v1531, %v1531
    %v1548 = vpack.c.b16 %v1532, %v1532
    %v1549 = vpack.c.b16 %v1533, %v1533
    %v1550 = vpack.c.b16 %v1534, %v1534
    %v1551 = vpack.c.b16 %v1535, %v1535
    %v1552 = vpack.c.b16 %v1536, %v1536
    %v1553 = vpack.c.b16 %v1537, %v1537
    %v1554 = vpack.c.b16 %v1538, %v1538
    %1571 = vst [vmem:[#allocation3] sm:$0xf] %v1539
    %1572 = vst [vmem:[#allocation3 + $0x4] sm:$0xf] %v1540
    %1573 = vst [vmem:[#allocation3 + $0x8] sm:$0xf] %v1541
    %1574 = vst [vmem:[#allocation3 + $0xc] sm:$0xf] %v1542
    %1575 = vst [vmem:[#allocation3 + $0x10] sm:$0xf] %v1543
    %1576 = vst [vmem:[#allocation3 + $0x14] sm:$0xf] %v1544
    %1577 = vst [vmem:[#allocation3 + $0x18] sm:$0xf] %v1545
    %1578 = vst [vmem:[#allocation3 + $0x1c] sm:$0xf] %v1546
    %1579 = vst [vmem:[#allocation3 + $0x20] sm:$0xf] %v1547
    %1580 = vst [vmem:[#allocation3 + $0x24] sm:$0xf] %v1548
    %1581 = vst [vmem:[#allocation3 + $0x28] sm:$0xf] %v1549
    %1582 = vst [vmem:[#allocation3 + $0x2c] sm:$0xf] %v1550
    %1583 = vst [vmem:[#allocation3 + $0x30] sm:$0xf] %v1551
    %1584 = vst [vmem:[#allocation3 + $0x34] sm:$0xf] %v1552
    %1585 = vst [vmem:[#allocation3 + $0x38] sm:$0xf] %v1553
    %1586 = vst [vmem:[#allocation3 + $0x3c] sm:$0xf] %v1554
    %v1587 = vld [vmem:[#allocation4] sm:$0xf]
    %v1588 = vld [vmem:[#allocation4 + $0x4] sm:$0xf]
    %v1589 = vld [vmem:[#allocation4 + $0x8] sm:$0xf]
    %v1590 = vld [vmem:[#allocation4 + $0xc] sm:$0xf]
    %v1591 = vld [vmem:[#allocation4 + $0x10] sm:$0xf]
    %v1592 = vld [vmem:[#allocation4 + $0x14] sm:$0xf]
    %v1593 = vld [vmem:[#allocation4 + $0x18] sm:$0xf]
    %v1594 = vld [vmem:[#allocation4 + $0x1c] sm:$0xf]
    %v1595 = vld [vmem:[#allocation4 + $0x20] sm:$0xf]
    %v1596 = vld [vmem:[#allocation4 + $0x24] sm:$0xf]
    %v1597 = vld [vmem:[#allocation4 + $0x28] sm:$0xf]
    %v1598 = vld [vmem:[#allocation4 + $0x2c] sm:$0xf]
    %v1599 = vld [vmem:[#allocation4 + $0x30] sm:$0xf]
    %v1600 = vld [vmem:[#allocation4 + $0x34] sm:$0xf]
    %v1601 = vld [vmem:[#allocation4 + $0x38] sm:$0xf]
    %v1602 = vld [vmem:[#allocation4 + $0x3c] sm:$0xf]
    %v1603 = vld [vmem:[#allocation3] sm:$0xf]
    %v1604 = vld [vmem:[#allocation3 + $0x4] sm:$0xf]
    %v1605 = vld [vmem:[#allocation3 + $0x8] sm:$0xf]
    %v1606 = vld [vmem:[#allocation3 + $0xc] sm:$0xf]
    %v1607 = vld [vmem:[#allocation3 + $0x10] sm:$0xf]
    %v1608 = vld [vmem:[#allocation3 + $0x14] sm:$0xf]
    %v1609 = vld [vmem:[#allocation3 + $0x18] sm:$0xf]
    %v1610 = vld [vmem:[#allocation3 + $0x1c] sm:$0xf]
    %v1611 = vld [vmem:[#allocation3 + $0x20] sm:$0xf]
    %v1612 = vld [vmem:[#allocation3 + $0x24] sm:$0xf]
    %v1613 = vld [vmem:[#allocation3 + $0x28] sm:$0xf]
    %v1614 = vld [vmem:[#allocation3 + $0x2c] sm:$0xf]
    %v1615 = vld [vmem:[#allocation3 + $0x30] sm:$0xf]
    %v1616 = vld [vmem:[#allocation3 + $0x34] sm:$0xf]
    %v1617 = vld [vmem:[#allocation3 + $0x38] sm:$0xf]
    %v1618 = vld [vmem:[#allocation3 + $0x3c] sm:$0xf]
    %v1635 = vunpack.c.l.b16 %v1587
    %v1636 = vunpack.c.l.b16 %v1588
    %v1637 = vunpack.c.l.b16 %v1589
    %v1638 = vunpack.c.l.b16 %v1590
    %v1639 = vunpack.c.l.b16 %v1591
    %v1640 = vunpack.c.l.b16 %v1592
    %v1641 = vunpack.c.l.b16 %v1593
    %v1642 = vunpack.c.l.b16 %v1594
    %v1643 = vunpack.c.l.b16 %v1595
    %v1644 = vunpack.c.l.b16 %v1596
    %v1645 = vunpack.c.l.b16 %v1597
    %v1646 = vunpack.c.l.b16 %v1598
    %v1647 = vunpack.c.l.b16 %v1599
    %v1648 = vunpack.c.l.b16 %v1600
    %v1649 = vunpack.c.l.b16 %v1601
    %v1650 = vunpack.c.l.b16 %v1602
    %v1651 = vpack.c.b16 %v1636, %v1635
    %v1652 = vpack.c.b16 %v1638, %v1637
    %v1653 = vpack.c.b16 %v1640, %v1639
    %v1654 = vpack.c.b16 %v1642, %v1641
    %v1655 = vpack.c.b16 %v1644, %v1643
    %v1656 = vpack.c.b16 %v1646, %v1645
    %v1657 = vpack.c.b16 %v1648, %v1647
    %v1658 = vpack.c.b16 %v1650, %v1649
    %v1683 = vunpack.c.l.b16 %v1603
    %v1684 = vunpack.c.l.b16 %v1604
    %v1685 = vunpack.c.l.b16 %v1605
    %v1686 = vunpack.c.l.b16 %v1606
    %v1687 = vunpack.c.l.b16 %v1607
    %v1688 = vunpack.c.l.b16 %v1608
    %v1689 = vunpack.c.l.b16 %v1609
    %v1690 = vunpack.c.l.b16 %v1610
    %v1691 = vunpack.c.l.b16 %v1611
    %v1692 = vunpack.c.l.b16 %v1612
    %v1693 = vunpack.c.l.b16 %v1613
    %v1694 = vunpack.c.l.b16 %v1614
    %v1695 = vunpack.c.l.b16 %v1615
    %v1696 = vunpack.c.l.b16 %v1616
    %v1697 = vunpack.c.l.b16 %v1617
    %v1698 = vunpack.c.l.b16 %v1618
    %v1699 = vpack.c.b16 %v1684, %v1683
    %v1700 = vpack.c.b16 %v1686, %v1685
    %v1701 = vpack.c.b16 %v1688, %v1687
    %v1702 = vpack.c.b16 %v1690, %v1689
    %v1703 = vpack.c.b16 %v1692, %v1691
    %v1704 = vpack.c.b16 %v1694, %v1693
    %v1705 = vpack.c.b16 %v1696, %v1695
    %v1706 = vpack.c.b16 %v1698, %v1697
    %1715 = vmatprep.subr.bf16.mxu0 0
    %1716 = vmatpush1.bf16.msra.mxu0 %v1706
    %1717 = vmatprep.subr.bf16.mxu0 0
    %1718 = vmatpush1.bf16.msra.mxu0 %v1705
    %1719 = vmatprep.subr.bf16.mxu0 0
    %1720 = vmatpush1.bf16.msra.mxu0 %v1704
    %1721 = vmatprep.subr.bf16.mxu0 0
    %1722 = vmatpush1.bf16.msra.mxu0 %v1703
    %1723 = vmatprep.subr.bf16.mxu0 0
    %1724 = vmatpush1.bf16.msra.mxu0 %v1702
    %1725 = vmatprep.subr.bf16.mxu0 0
    %1726 = vmatpush1.bf16.msra.mxu0 %v1701
    %1727 = vmatprep.subr.bf16.mxu0 0
    %1728 = vmatpush1.bf16.msra.mxu0 %v1700
    %1729 = vmatprep.subr.bf16.mxu0 0
    %1730 = vmatpush1.bf16.msra.mxu0 %v1699
    %1731 = vmatprep.subr.bf16.mxu0 0
    %1732 = vmatpush2.bf16.msra.mxu0 0
    %1733 = vmatprep.subr.bf16.mxu0 0
    %1734 = vmatpush2.bf16.msra.mxu0 0
    %1735 = vmatprep.subr.bf16.mxu0 0
    %1736 = vmatpush2.bf16.msra.mxu0 0
    %1737 = vmatprep.subr.bf16.mxu0 0
    %1738 = vmatpush2.bf16.msra.mxu0 0
    %1739 = vmatprep.subr.bf16.mxu0 0
    %1740 = vmatpush2.bf16.msra.mxu0 0
    %1741 = vmatprep.subr.bf16.mxu0 0
    %1742 = vmatpush2.bf16.msra.mxu0 0
    %1743 = vmatprep.subr.bf16.mxu0 0
    %1744 = vmatpush2.bf16.msra.mxu0 0
    %1745 = vmatprep.subr.bf16.mxu0 0
    %1746 = vmatpush2.bf16.msra.mxu0 0
    %1747 = vmatprep.mubr.bf16.mxu0 0
    %1748 = vmatmul.mubr.bf16.gmra.mxu0 %v1651
    %v1749 = vpop.f32.mrf.mxu0
    %v1750 = vadd.f32 0.0, %v1749
    %v1751 = vpop.f32.mrf.mxu0
    %v1752 = vpop.f32.mrf.mxu0
    %v1753 = vadd.f32 0.0, %v1752
    %v1754 = vpop.f32.mrf.mxu0
    %1755 = vmatprep.mubr.bf16.mxu0 0
    %1756 = vmatmul.mubr.bf16.gmra.mxu0 %v1652
    %v1757 = vpop.f32.mrf.mxu0
    %v1758 = vadd.f32 0.0, %v1757
    %v1759 = vpop.f32.mrf.mxu0
    %v1760 = vpop.f32.mrf.mxu0
    %v1761 = vadd.f32 0.0, %v1760
    %v1762 = vpop.f32.mrf.mxu0
    %1763 = vmatprep.mubr.bf16.mxu0 0
    %1764 = vmatmul.mubr.bf16.gmra.mxu0 %v1653
    %v1765 = vpop.f32.mrf.mxu0
    %v1766 = vadd.f32 0.0, %v1765
    %v1767 = vpop.f32.mrf.mxu0
    %v1768 = vpop.f32.mrf.mxu0
    %v1769 = vadd.f32 0.0, %v1768
    %v1770 = vpop.f32.mrf.mxu0
    %1771 = vmatprep.mubr.bf16.mxu0 0
    %1772 = vmatmul.mubr.bf16.gmra.mxu0 %v1654
    %v1773 = vpop.f32.mrf.mxu0
    %v1774 = vadd.f32 0.0, %v1773
    %v1775 = vpop.f32.mrf.mxu0
    %v1776 = vpop.f32.mrf.mxu0
    %v1777 = vadd.f32 0.0, %v1776
    %v1778 = vpop.f32.mrf.mxu0
    %1779 = vmatprep.mubr.bf16.mxu0 0
    %1780 = vmatmul.mubr.bf16.gmra.mxu0 %v1655
    %v1781 = vpop.f32.mrf.mxu0
    %v1782 = vadd.f32 0.0, %v1781
    %v1783 = vpop.f32.mrf.mxu0
    %v1784 = vpop.f32.mrf.mxu0
    %v1785 = vadd.f32 0.0, %v1784
    %v1786 = vpop.f32.mrf.mxu0
    %1787 = vmatprep.mubr.bf16.mxu0 0
    %1788 = vmatmul.mubr.bf16.gmra.mxu0 %v1656
    %v1789 = vpop.f32.mrf.mxu0
    %v1790 = vadd.f32 0.0, %v1789
    %v1791 = vpop.f32.mrf.mxu0
    %v1792 = vpop.f32.mrf.mxu0
    %v1793 = vadd.f32 0.0, %v1792
    %v1794 = vpop.f32.mrf.mxu0
    %1795 = vmatprep.mubr.bf16.mxu0 0
    %1796 = vmatmul.mubr.bf16.gmra.mxu0 %v1657
    %v1797 = vpop.f32.mrf.mxu0
    %v1798 = vadd.f32 0.0, %v1797
    %v1799 = vpop.f32.mrf.mxu0
    %v1800 = vpop.f32.mrf.mxu0
    %v1801 = vadd.f32 0.0, %v1800
    %v1802 = vpop.f32.mrf.mxu0
    %1803 = vmatprep.mubr.bf16.mxu0 0
    %1804 = vmatmul.mubr.bf16.gmra.mxu0 %v1658
    %v1805 = vpop.f32.mrf.mxu0
    %v1806 = vadd.f32 0.0, %v1805
    %v1807 = vpop.f32.mrf.mxu0
    %v1808 = vpop.f32.mrf.mxu0
    %v1809 = vadd.f32 0.0, %v1808
    %v1810 = vpop.f32.mrf.mxu0
    %1811 = vdwg.mxu0
    %v1812 = vpack.c.bf16 %v1753, %v1750
    %v1813 = vpack.c.bf16 %v1761, %v1758
    %v1814 = vpack.c.bf16 %v1769, %v1766
    %v1815 = vpack.c.bf16 %v1777, %v1774
    %v1816 = vpack.c.bf16 %v1785, %v1782
    %v1817 = vpack.c.bf16 %v1793, %v1790
    %v1818 = vpack.c.bf16 %v1801, %v1798
    %v1819 = vpack.c.bf16 %v1809, %v1806
    %s1820 = scalar_lea.vmem [#allocation9], 192
    %v1821 = vld [vmem:[%s1820] sm:$0xf]
    %v1822 = vld [vmem:[%s1820 + $0x4] sm:$0xf]
    %v1823 = vld [vmem:[%s1820 + $0x8] sm:$0xf]
    %v1824 = vld [vmem:[%s1820 + $0xc] sm:$0xf]
    %v1825 = vld [vmem:[%s1820 + $0x10] sm:$0xf]
    %v1826 = vld [vmem:[%s1820 + $0x14] sm:$0xf]
    %v1827 = vld [vmem:[%s1820 + $0x18] sm:$0xf]
    %v1828 = vld [vmem:[%s1820 + $0x1c] sm:$0xf]
    %v1829 = vld [vmem:[%s1820 + $0x20] sm:$0xf]
    %v1830 = vld [vmem:[%s1820 + $0x24] sm:$0xf]
    %v1831 = vld [vmem:[%s1820 + $0x28] sm:$0xf]
    %v1832 = vld [vmem:[%s1820 + $0x2c] sm:$0xf]
    %v1833 = vld [vmem:[%s1820 + $0x30] sm:$0xf]
    %v1834 = vld [vmem:[%s1820 + $0x34] sm:$0xf]
    %v1835 = vld [vmem:[%s1820 + $0x38] sm:$0xf]
    %v1836 = vld [vmem:[%s1820 + $0x3c] sm:$0xf]
    %s1837 = scalar_lea.vmem %s3, 3
    %v1838 = vld [vmem:[%s1837] sm:$0x1]
    %v1840 = vlaneseq
    %v1841 = vshrl.u32 %v1840, 7
    %v1842 = vsub.s32 0, %v1841
    %v1843 = vrot.slane %v1838, %v1842
    %v1861 = vunpack.c.l.b16 %v1821
    %v1862 = vunpack.c.l.b16 %v1822
    %v1863 = vunpack.c.l.b16 %v1823
    %v1864 = vunpack.c.l.b16 %v1824
    %v1865 = vunpack.c.l.b16 %v1825
    %v1866 = vunpack.c.l.b16 %v1826
    %v1867 = vunpack.c.l.b16 %v1827
    %v1868 = vunpack.c.l.b16 %v1828
    %v1869 = vunpack.c.l.b16 %v1829
    %v1870 = vunpack.c.l.b16 %v1830
    %v1871 = vunpack.c.l.b16 %v1831
    %v1872 = vunpack.c.l.b16 %v1832
    %v1873 = vunpack.c.l.b16 %v1833
    %v1874 = vunpack.c.l.b16 %v1834
    %v1875 = vunpack.c.l.b16 %v1835
    %v1876 = vunpack.c.l.b16 %v1836
    %v1877 = vpack.c.b16 %v1862, %v1861
    %v1878 = vpack.c.b16 %v1864, %v1863
    %v1879 = vpack.c.b16 %v1866, %v1865
    %v1880 = vpack.c.b16 %v1868, %v1867
    %v1881 = vpack.c.b16 %v1870, %v1869
    %v1882 = vpack.c.b16 %v1872, %v1871
    %v1883 = vpack.c.b16 %v1874, %v1873
    %v1884 = vpack.c.b16 %v1876, %v1875
    %1893 = vmatprep.subr.bf16.mxu0 0
    %1894 = vmatpush1.bf16.msra.mxu0 %v1884
    %1895 = vmatprep.subr.bf16.mxu0 0
    %1896 = vmatpush1.bf16.msra.mxu0 %v1883
    %1897 = vmatprep.subr.bf16.mxu0 0
    %1898 = vmatpush1.bf16.msra.mxu0 %v1882
    %1899 = vmatprep.subr.bf16.mxu0 0
    %1900 = vmatpush1.bf16.msra.mxu0 %v1881
    %1901 = vmatprep.subr.bf16.mxu0 0
    %1902 = vmatpush1.bf16.msra.mxu0 %v1880
    %1903 = vmatprep.subr.bf16.mxu0 0
    %1904 = vmatpush1.bf16.msra.mxu0 %v1879
    %1905 = vmatprep.subr.bf16.mxu0 0
    %1906 = vmatpush1.bf16.msra.mxu0 %v1878
    %1907 = vmatprep.subr.bf16.mxu0 0
    %1908 = vmatpush1.bf16.msra.mxu0 %v1877
    %1909 = vmatprep.subr.bf16.mxu0 0
    %1910 = vmatpush2.bf16.msra.mxu0 0
    %1911 = vmatprep.subr.bf16.mxu0 0
    %1912 = vmatpush2.bf16.msra.mxu0 0
    %1913 = vmatprep.subr.bf16.mxu0 0
    %1914 = vmatpush2.bf16.msra.mxu0 0
    %1915 = vmatprep.subr.bf16.mxu0 0
    %1916 = vmatpush2.bf16.msra.mxu0 0
    %1917 = vmatprep.subr.bf16.mxu0 0
    %1918 = vmatpush2.bf16.msra.mxu0 0
    %1919 = vmatprep.subr.bf16.mxu0 0
    %1920 = vmatpush2.bf16.msra.mxu0 0
    %1921 = vmatprep.subr.bf16.mxu0 0
    %1922 = vmatpush2.bf16.msra.mxu0 0
    %1923 = vmatprep.subr.bf16.mxu0 0
    %1924 = vmatpush2.bf16.msra.mxu0 0
    %1925 = vmatprep.mubr.bf16.mxu0 0
    %1926 = vmatmul.mubr.bf16.gmra.mxu0 %v1812
    %v1927 = vpop.f32.mrf.mxu0
    %v1928 = vadd.f32 %v1843, %v1927
    %v1929 = vpop.f32.mrf.mxu0
    %v1930 = vpop.f32.mrf.mxu0
    %v1931 = vadd.f32 %v1843, %v1930
    %v1932 = vpop.f32.mrf.mxu0
    %1933 = vmatprep.mubr.bf16.mxu0 0
    %1934 = vmatmul.mubr.bf16.gmra.mxu0 %v1813
    %v1935 = vpop.f32.mrf.mxu0
    %v1936 = vadd.f32 %v1843, %v1935
    %v1937 = vpop.f32.mrf.mxu0
    %v1938 = vpop.f32.mrf.mxu0
    %v1939 = vadd.f32 %v1843, %v1938
    %v1940 = vpop.f32.mrf.mxu0
    %1941 = vmatprep.mubr.bf16.mxu0 0
    %1942 = vmatmul.mubr.bf16.gmra.mxu0 %v1814
    %v1943 = vpop.f32.mrf.mxu0
    %v1944 = vadd.f32 %v1843, %v1943
    %v1945 = vpop.f32.mrf.mxu0
    %v1946 = vpop.f32.mrf.mxu0
    %v1947 = vadd.f32 %v1843, %v1946
    %v1948 = vpop.f32.mrf.mxu0
    %1949 = vmatprep.mubr.bf16.mxu0 0
    %1950 = vmatmul.mubr.bf16.gmra.mxu0 %v1815
    %v1951 = vpop.f32.mrf.mxu0
    %v1952 = vadd.f32 %v1843, %v1951
    %v1953 = vpop.f32.mrf.mxu0
    %v1954 = vpop.f32.mrf.mxu0
    %v1955 = vadd.f32 %v1843, %v1954
    %v1956 = vpop.f32.mrf.mxu0
    %1957 = vmatprep.mubr.bf16.mxu0 0
    %1958 = vmatmul.mubr.bf16.gmra.mxu0 %v1816
    %v1959 = vpop.f32.mrf.mxu0
    %v1960 = vadd.f32 %v1843, %v1959
    %v1961 = vpop.f32.mrf.mxu0
    %v1962 = vpop.f32.mrf.mxu0
    %v1963 = vadd.f32 %v1843, %v1962
    %v1964 = vpop.f32.mrf.mxu0
    %1965 = vmatprep.mubr.bf16.mxu0 0
    %1966 = vmatmul.mubr.bf16.gmra.mxu0 %v1817
    %v1967 = vpop.f32.mrf.mxu0
    %v1968 = vadd.f32 %v1843, %v1967
    %v1969 = vpop.f32.mrf.mxu0
    %v1970 = vpop.f32.mrf.mxu0
    %v1971 = vadd.f32 %v1843, %v1970
    %v1972 = vpop.f32.mrf.mxu0
    %1973 = vmatprep.mubr.bf16.mxu0 0
    %1974 = vmatmul.mubr.bf16.gmra.mxu0 %v1818
    %v1975 = vpop.f32.mrf.mxu0
    %v1976 = vadd.f32 %v1843, %v1975
    %v1977 = vpop.f32.mrf.mxu0
    %v1978 = vpop.f32.mrf.mxu0
    %v1979 = vadd.f32 %v1843, %v1978
    %v1980 = vpop.f32.mrf.mxu0
    %1981 = vmatprep.mubr.bf16.mxu0 0
    %1982 = vmatmul.mubr.bf16.gmra.mxu0 %v1819
    %v1983 = vpop.f32.mrf.mxu0
    %v1984 = vadd.f32 %v1843, %v1983
    %v1985 = vpop.f32.mrf.mxu0
    %v1986 = vpop.f32.mrf.mxu0
    %v1987 = vadd.f32 %v1843, %v1986
    %v1988 = vpop.f32.mrf.mxu0
    %1989 = vdwg.mxu0
    %1990 = vst [vmem:[#allocation10] sm:$0xff] %v1928
    %1991 = vst [vmem:[#allocation10 + $0x8] sm:$0xff] %v1931
    %1992 = vst [vmem:[#allocation10 + $0x10] sm:$0xff] %v1936
    %1993 = vst [vmem:[#allocation10 + $0x18] sm:$0xff] %v1939
    %1994 = vst [vmem:[#allocation10 + $0x20] sm:$0xff] %v1944
    %1995 = vst [vmem:[#allocation10 + $0x28] sm:$0xff] %v1947
    %1996 = vst [vmem:[#allocation10 + $0x30] sm:$0xff] %v1952
    %1997 = vst [vmem:[#allocation10 + $0x38] sm:$0xff] %v1955
    %1998 = vst [vmem:[#allocation10 + $0x40] sm:$0xff] %v1960
    %1999 = vst [vmem:[#allocation10 + $0x48] sm:$0xff] %v1963
    %2000 = vst [vmem:[#allocation10 + $0x50] sm:$0xff] %v1968
    %2001 = vst [vmem:[#allocation10 + $0x58] sm:$0xff] %v1971
    %2002 = vst [vmem:[#allocation10 + $0x60] sm:$0xff] %v1976
    %2003 = vst [vmem:[#allocation10 + $0x68] sm:$0xff] %v1979
    %2004 = vst [vmem:[#allocation10 + $0x70] sm:$0xff] %v1984
    %2005 = vst [vmem:[#allocation10 + $0x78] sm:$0xff] %v1987
    // Predicated region
    $region30: #{tpu_custom_call.1} parent=1 // pred_check
      _
    $region31: #{tpu_custom_call.1} parent=1 // pred_check_branch
      %2007 = sbr.rel (0) target = $region33
    $region32: #{tpu_custom_call.1} parent=1 // pred_region
      %s2009 = ssub.s32 2048, 2048
      %2010 = vsyncadd [#allocation6], %s2009
      %s2011 = sshll.u32 [#allocation10], 4
      %s2012 = int_to_ptr.vmem [resolvable:$true] %s2011
      %2017 = dma.vmem_to_hbm [thread:$0]  %s2012, 2048, %s4, [#allocation6], 128, 128, 8
    $region33: #{tpu_custom_call.1} parent=1 // pred_fallthru
      _
    // Predicated region
    $region34: #{tpu_custom_call.1} parent=1 // pred_check
      _
    $region35: #{tpu_custom_call.1} parent=1 // pred_check_branch
      %2019 = sbr.rel (0) target = $region37
    $region36: #{tpu_custom_call.1} parent=1 // pred_region
      %2020 = dma.done [#allocation6], 2048
    $region37: #{tpu_custom_call.1} parent=1 // pred_fallthru
      _
    %2021 = vsyncpa [#allocation5], 1
    %2022 = vsyncpa [#allocation8], 1
    %2023 = vsyncpa [#allocation6], 1

</llo_original>
